<compile_context>
chip_gen: v7x
topology: tpu7x:2x2x1
jax: 0.10.0
libtpu: 0.0.40
codegen_flags: <defaults>
</compile_context>

<pallas_src>
import functools

import jax
import jax.numpy as jnp
import numpy as np
from jax.experimental import pallas as pl
from jax.experimental.pallas import tpu as pltpu


def cnn_kernel(tok_ref, emb_ref,
               w0_ref, b0_ref, w1_ref, b1_ref, w2_ref, b2_ref,
               f0_ref, f1_ref, f2_ref, fcb_ref, out_ref,
               *, tile_n, seq_len, kernel_sizes):
    tl = tok_ref.shape[0]                # tile_n * seq_len (flat batch-major sequence)
    d = emb_ref.shape[1]                 # embedding dim
    n_ids = emb_ref.shape[0]             # padded token-id range (lane-dense, 128)
    c_pad = b0_ref.shape[1]              # padded conv channels (128)
    v_pad = out_ref.shape[1]             # padded classifier width (128)
    k_max = max(kernel_sizes)

    # ---- fused embedding lookup: exact one-hot matmul on the MXU ----
    tok = tok_ref[...]                                                      # [tl, 1] int32
    eq = tok == jax.lax.broadcasted_iota(jnp.int32, (tl, n_ids), 1)         # [tl, n_ids]
    onehot = jnp.where(eq, 1.0, 0.0).astype(jnp.bfloat16)
    x = jnp.dot(onehot, emb_ref[...], preferred_element_type=jnp.float32)   # [tl, d]
    x = x.astype(jnp.bfloat16)

    # Zero-pad the flat sequence so shifted windows never read out of bounds.
    x_pad = jnp.concatenate([x, jnp.zeros((k_max - 1, d), jnp.bfloat16)], axis=0)

    acc = jnp.zeros((tile_n, v_pad), jnp.float32)
    conv_refs = ((w0_ref, b0_ref, f0_ref),
                 (w1_ref, b1_ref, f1_ref),
                 (w2_ref, b2_ref, f2_ref))
    for ksz, (w_ref, b_ref, f_ref) in zip(kernel_sizes, conv_refs):
        l_out = seq_len - ksz + 1
        # im2col: one full-depth (ksz*d) contraction instead of ksz shallow dots.
        win = jnp.concatenate([x_pad[k:k + tl, :] for k in range(ksz)], axis=-1)  # [tl, ksz*d]
        conv = jnp.dot(win, w_ref[...], preferred_element_type=jnp.float32)       # [tl, c_pad]
        conv = conv.reshape(tile_n, seq_len, c_pad)
        t_idx = jax.lax.broadcasted_iota(jnp.int32, conv.shape, 1)
        conv = jnp.where(t_idx < l_out, conv, -1e30)     # kill windows crossing batch boundary
        # Bias + ReLU hoisted past the time max-pool (equivalent: bias is time-invariant,
        # ReLU is monotone).
        pooled = jnp.maximum(jnp.max(conv, axis=1) + b_ref[...], 0.0)              # [tile_n, c_pad]
        # Dropout(p=0.5) is identity at inference time.
        acc = acc + jnp.dot(pooled.astype(jnp.bfloat16), f_ref[...],
                            preferred_element_type=jnp.float32)                    # [tile_n, v_pad]
    out_ref[...] = acc + fcb_ref[...]


def cnn_model_forward(tokens, emb_table, conv_ws, conv_bs, fc_w_t, fc_b, *, tile_n=8):
    """tokens: [N, L] int32 token ids.  Returns {'output': [N, vocab_size]} float32."""
    N, L = tokens.shape
    num_ids, D = emb_table.shape
    kernel_sizes = tuple(int(w.shape[0]) for w in conv_ws)
    vocab_size = fc_w_t.shape[1]
    C_PAD = 128                                  # lane-dense conv channels
    V_PAD = 128                                  # lane-dense classifier output
    ID_PAD = max(128, -(-num_ids // 128) * 128)  # lane-dense one-hot width

    # --- batch padding / flattening (token ids) ---
    n_pad = -(-N // tile_n) * tile_n
    tok_p = jnp.zeros((n_pad, L), jnp.int32).at[:N, :].set(tokens.astype(jnp.int32))
    tok_flat = tok_p.reshape(n_pad * L, 1)

    # --- parameter padding / packing (bf16 matmul operands, f32 biases) ---
    emb_p = jnp.zeros((ID_PAD, D), jnp.bfloat16).at[:num_ids, :].set(
        emb_table.astype(jnp.bfloat16))

    w_flats, b_pads, fc_blocks = [], [], []
    row = 0
    for w, b in zip(conv_ws, conv_bs):
        K, _, C = w.shape
        w_flats.append(jnp.zeros((K * D, C_PAD), jnp.bfloat16)
                       .at[:, :C].set(w.reshape(K * D, C).astype(jnp.bfloat16)))
        b_pads.append(jnp.zeros((1, C_PAD), jnp.float32)
                      .at[:, :C].set(b.reshape(1, C).astype(jnp.float32)))
        fc_blocks.append(jnp.zeros((C_PAD, V_PAD), jnp.bfloat16)
                         .at[:C, :vocab_size].set(fc_w_t[row:row + C, :].astype(jnp.bfloat16)))
        row += C
    fcb_p = jnp.zeros((1, V_PAD), jnp.float32).at[:, :vocab_size].set(
        fc_b.reshape(1, vocab_size).astype(jnp.float32))

    grid = (n_pad // tile_n,)
    kern = functools.partial(cnn_kernel, tile_n=tile_n, seq_len=L,
                             kernel_sizes=kernel_sizes)

    def rep(arr):  # weight block replicated across the batch grid (DMA'd once)
        return pl.BlockSpec(arr.shape, lambda i: (0, 0))

    in_specs = [pl.BlockSpec((tile_n * L, 1), lambda i: (i, 0)),   # tokens (batch-tiled)
                rep(emb_p),
                rep(w_flats[0]), rep(b_pads[0]),
                rep(w_flats[1]), rep(b_pads[1]),
                rep(w_flats[2]), rep(b_pads[2]),
                rep(fc_blocks[0]), rep(fc_blocks[1]), rep(fc_blocks[2]),
                rep(fcb_p)]
    out_specs = pl.BlockSpec((tile_n, V_PAD), lambda i: (i, 0))

    flops = 2 * n_pad * L * ID_PAD * D
    flops += sum(2 * n_pad * L * (K * D) * C_PAD for K in kernel_sizes)
    flops += len(kernel_sizes) * 2 * n_pad * C_PAD * V_PAD
    bytes_accessed = (tok_flat.size * 4 + emb_p.size * 2
                      + sum(w.size * 2 for w in w_flats)
                      + sum(b.size * 4 for b in b_pads)
                      + sum(f.size * 2 for f in fc_blocks)
                      + fcb_p.size * 4 + n_pad * V_PAD * 4)

    out_pad = pl.pallas_call(
        kern,
        out_shape=jax.ShapeDtypeStruct((n_pad, V_PAD), jnp.float32),
        grid=grid,
        in_specs=in_specs,
        out_specs=out_specs,
        compiler_params=pltpu.CompilerParams(dimension_semantics=("parallel",)),
        cost_estimate=pl.CostEstimate(flops=int(flops), transcendentals=0,
                                      bytes_accessed=int(bytes_accessed)),
    )(tok_flat, emb_p,
      w_flats[0], b_pads[0], w_flats[1], b_pads[1], w_flats[2], b_pads[2],
      fc_blocks[0], fc_blocks[1], fc_blocks[2], fcb_p)

    return {'output': out_pad[:N, :vocab_size]}


def reference_forward(tokens, emb_table, conv_ws, conv_bs, fc_w_t, fc_b):
    """Pure-JAX reference with the module's op order (bf16 matmul operands, f32 accum)."""
    x = jnp.take(emb_table.astype(jnp.bfloat16), tokens, axis=0)   # [N, L, D]
    N, L, D = x.shape
    pooled_parts = []
    for w, b in zip(conv_ws, conv_bs):
        K, _, C = w.shape
        Lout = L - K + 1
        acc = jnp.zeros((N, Lout, C), jnp.float32)
        for k in range(K):
            acc = acc + jnp.einsum('nld,dc->nlc', x[:, k:k + Lout, :],
                                   w[k].astype(jnp.bfloat16),
                                   preferred_element_type=jnp.float32)
        acc = jax.nn.relu(acc + b.reshape(1, 1, C))                # bias + ReLU before pool
        pooled_parts.append(jnp.max(acc, axis=1))
    pooled = jnp.concatenate(pooled_parts, axis=-1)                # [N, sum_C]
    return (jnp.dot(pooled.astype(jnp.bfloat16), fc_w_t.astype(jnp.bfloat16),
                    preferred_element_type=jnp.float32)
            + fc_b.reshape(1, -1))


if __name__ == "__main__":
    # Small shapes consistent with the module's forward:
    #   input_size (embedding rows) = 50, embedding_dim = 32,
    #   kernel_nums = (16, 16, 16), kernel_sizes = (3, 4, 5),
    #   vocab_size (num classes) = 8, batch = 2, seq_len = 16.
    N, L = 2, 16
    input_size, embedding_dim = 50, 32
    kernel_nums = (16, 16, 16)
    kernel_sizes = (3, 4, 5)
    vocab_size = 8

    key = jax.random.PRNGKey(0)
    keys = jax.random.split(key, 12)

    # Deterministic synthetic parameters (no checkpoint / file IO).
    emb_table = jax.random.normal(keys[0], (input_size, embedding_dim), jnp.float32) * 0.1
    conv_ws, conv_bs = [], []
    for i, (K, C) in enumerate(zip(kernel_sizes, kernel_nums)):
        conv_ws.append(jax.random.normal(keys[1 + i], (K, embedding_dim, C), jnp.float32) * 0.05)
        conv_bs.append(jax.random.normal(keys[4 + i], (1, C), jnp.float32) * 0.05)
    sum_c = sum(kernel_nums)
    fc_w_t = jax.random.normal(keys[7], (sum_c, vocab_size), jnp.float32) * 0.05   # [in, out]
    fc_b = jax.random.normal(keys[8], (1, vocab_size), jnp.float32) * 0.05

    tokens = jax.random.randint(keys[9], (N, L), 0, input_size, jnp.int32)

    result = cnn_model_forward(tokens, emb_table, conv_ws, conv_bs, fc_w_t, fc_b)
    out = jax.block_until_ready(result['output'])

    ref = jax.block_until_ready(
        reference_forward(tokens, emb_table, conv_ws, conv_bs, fc_w_t, fc_b))
    assert out.shape == (N, vocab_size)
    np.testing.assert_allclose(np.asarray(out), np.asarray(ref), rtol=1e-2, atol=1e-3)

    print("KERNEL_OK")
</pallas_src>

<mosaic_0001>
module attributes {stable_mosaic.version = 11 : i64} {
  func.func @cnn_kernel(%arg0: i32, %arg1: memref<128x1xi32, #tpu.memory_space<vmem>>, %arg2: memref<128x32xbf16, #tpu.memory_space<vmem>>, %arg3: memref<96x128xbf16, #tpu.memory_space<vmem>>, %arg4: memref<1x128xf32, #tpu.memory_space<vmem>>, %arg5: memref<128x128xbf16, #tpu.memory_space<vmem>>, %arg6: memref<1x128xf32, #tpu.memory_space<vmem>>, %arg7: memref<160x128xbf16, #tpu.memory_space<vmem>>, %arg8: memref<1x128xf32, #tpu.memory_space<vmem>>, %arg9: memref<128x128xbf16, #tpu.memory_space<vmem>>, %arg10: memref<128x128xbf16, #tpu.memory_space<vmem>>, %arg11: memref<128x128xbf16, #tpu.memory_space<vmem>>, %arg12: memref<1x128xf32, #tpu.memory_space<vmem>>, %arg13: memref<8x128xf32, #tpu.memory_space<vmem>>) attributes {dimension_semantics = [#tpu.dimension_semantics<parallel>], iteration_bounds = array<i64: 1>, scalar_prefetch = 0 : i64, scratch_operands = 0 : i64, tpu.core_type = #tpu.core_type<tc>, window_params = [{transform_indices = @transform_0, window_bounds = array<i64: 128, 1>}, {pipeline_mode = #tpu.pipeline_mode<synchronous>, transform_indices = @transform_1, window_bounds = array<i64: 128, 32>}, {pipeline_mode = #tpu.pipeline_mode<synchronous>, transform_indices = @transform_2, window_bounds = array<i64: 96, 128>}, {pipeline_mode = #tpu.pipeline_mode<synchronous>, transform_indices = @transform_3, window_bounds = array<i64: 1, 128>}, {pipeline_mode = #tpu.pipeline_mode<synchronous>, transform_indices = @transform_4, window_bounds = array<i64: 128, 128>}, {pipeline_mode = #tpu.pipeline_mode<synchronous>, transform_indices = @transform_5, window_bounds = array<i64: 1, 128>}, {pipeline_mode = #tpu.pipeline_mode<synchronous>, transform_indices = @transform_6, window_bounds = array<i64: 160, 128>}, {pipeline_mode = #tpu.pipeline_mode<synchronous>, transform_indices = @transform_7, window_bounds = array<i64: 1, 128>}, {pipeline_mode = #tpu.pipeline_mode<synchronous>, transform_indices = @transform_8, window_bounds = array<i64: 128, 128>}, {pipeline_mode = #tpu.pipeline_mode<synchronous>, transform_indices = @transform_9, window_bounds = array<i64: 128, 128>}, {pipeline_mode = #tpu.pipeline_mode<synchronous>, transform_indices = @transform_10, window_bounds = array<i64: 128, 128>}, {pipeline_mode = #tpu.pipeline_mode<synchronous>, transform_indices = @transform_11, window_bounds = array<i64: 1, 128>}, {transform_indices = @transform_12, window_bounds = array<i64: 8, 128>}]} {
    %c0 = arith.constant 0 : index
    %c0_0 = arith.constant 0 : index
    %0 = vector.load %arg1[%c0, %c0_0] : memref<128x1xi32, #tpu.memory_space<vmem>>, vector<128x1xi32>
    %1 = tpu.iota {dimensions = array<i32: 1>} : vector<128x128xi32>
    %2 = vector.broadcast %0 : vector<128x1xi32> to vector<128x128xi32>
    %3 = arith.cmpi eq, %2, %1 : vector<128x128xi32>
    %cst = arith.constant 1.000000e+00 : f32
    %cst_1 = arith.constant 0.000000e+00 : f32
    %4 = vector.broadcast %cst : f32 to vector<128x128xf32>
    %5 = vector.broadcast %cst_1 : f32 to vector<128x128xf32>
    %6 = arith.select %3, %4, %5 : vector<128x128xi1>, vector<128x128xf32>
    %7 = arith.truncf %6 : vector<128x128xf32> to vector<128x128xbf16>
    %c0_2 = arith.constant 0 : index
    %c0_3 = arith.constant 0 : index
    %8 = vector.load %arg2[%c0_2, %c0_3] : memref<128x32xbf16, #tpu.memory_space<vmem>>, vector<128x32xbf16>
    %cst_4 = arith.constant dense<0.000000e+00> : vector<128x32xf32>
    %9 = tpu.matmul %7, %8, %cst_4 {dimension_numbers = #tpu.dot_dimension_numbers<[1], [0], [0], [1], [0, 0, 1, 1], [], []>} : vector<128x128xbf16>, vector<128x32xbf16>, vector<128x32xf32> -> vector<128x32xf32>
    %10 = arith.truncf %9 : vector<128x32xf32> to vector<128x32xbf16>
    %cst_5 = arith.constant 0.000000e+00 : bf16
    %11 = vector.broadcast %cst_5 : bf16 to vector<4x32xbf16>
    %12 = tpu.concatenate %10, %11 in 0 : vector<128x32xbf16>, vector<4x32xbf16> -> vector<132x32xbf16>
    %cst_6 = arith.constant 0.000000e+00 : f32
    %13 = vector.broadcast %cst_6 : f32 to vector<8x128xf32>
    %14 = vector.extract_strided_slice %12 {offsets = [0, 0], sizes = [128, 32], strides = [1, 1]} : vector<132x32xbf16> to vector<128x32xbf16>
    %15 = vector.extract_strided_slice %12 {offsets = [1, 0], sizes = [128, 32], strides = [1, 1]} : vector<132x32xbf16> to vector<128x32xbf16>
    %16 = vector.extract_strided_slice %12 {offsets = [2, 0], sizes = [128, 32], strides = [1, 1]} : vector<132x32xbf16> to vector<128x32xbf16>
    %17 = tpu.concatenate %14, %15, %16 in 1 : vector<128x32xbf16>, vector<128x32xbf16>, vector<128x32xbf16> -> vector<128x96xbf16>
    %c0_7 = arith.constant 0 : index
    %c0_8 = arith.constant 0 : index
    %18 = vector.load %arg3[%c0_7, %c0_8] : memref<96x128xbf16, #tpu.memory_space<vmem>>, vector<96x128xbf16>
    %cst_9 = arith.constant dense<0.000000e+00> : vector<128x128xf32>
    %19 = tpu.matmul %17, %18, %cst_9 {dimension_numbers = #tpu.dot_dimension_numbers<[1], [0], [0], [1], [0, 0, 1, 1], [], []>} : vector<128x96xbf16>, vector<96x128xbf16>, vector<128x128xf32> -> vector<128x128xf32>
    %20 = vector.shape_cast %19 : vector<128x128xf32> to vector<8x16x128xf32>
    %21 = tpu.iota {dimensions = array<i32: 1>} : vector<8x16x128xi32>
    %c14_i32 = arith.constant 14 : i32
    %22 = vector.broadcast %c14_i32 : i32 to vector<8x16x128xi32>
    %23 = arith.cmpi slt, %21, %22 : vector<8x16x128xi32>
    %cst_10 = arith.constant -1.000000e+30 : f32
    %24 = vector.broadcast %cst_10 : f32 to vector<8x16x128xf32>
    %25 = arith.select %23, %20, %24 : vector<8x16x128xi1>, vector<8x16x128xf32>
    %cst_11 = arith.constant dense<0xFF800000> : vector<8x128xf32>
    %26 = vector.multi_reduction <maximumf>, %25, %cst_11 [1] : vector<8x16x128xf32> to vector<8x128xf32>
    %c0_12 = arith.constant 0 : index
    %c0_13 = arith.constant 0 : index
    %27 = vector.load %arg4[%c0_12, %c0_13] : memref<1x128xf32, #tpu.memory_space<vmem>>, vector<1x128xf32>
    %28 = vector.broadcast %27 : vector<1x128xf32> to vector<8x128xf32>
    %29 = arith.addf %26, %28 : vector<8x128xf32>
    %cst_14 = arith.constant 0.000000e+00 : f32
    %30 = vector.broadcast %cst_14 : f32 to vector<8x128xf32>
    %31 = arith.maximumf %29, %30 : vector<8x128xf32>
    %32 = arith.truncf %31 : vector<8x128xf32> to vector<8x128xbf16>
    %c0_15 = arith.constant 0 : index
    %c0_16 = arith.constant 0 : index
    %33 = vector.load %arg9[%c0_15, %c0_16] : memref<128x128xbf16, #tpu.memory_space<vmem>>, vector<128x128xbf16>
    %cst_17 = arith.constant dense<0.000000e+00> : vector<8x128xf32>
    %34 = tpu.matmul %32, %33, %cst_17 {dimension_numbers = #tpu.dot_dimension_numbers<[1], [0], [0], [1], [0, 0, 1, 1], [], []>} : vector<8x128xbf16>, vector<128x128xbf16>, vector<8x128xf32> -> vector<8x128xf32>
    %35 = arith.addf %13, %34 : vector<8x128xf32>
    %36 = vector.extract_strided_slice %12 {offsets = [0, 0], sizes = [128, 32], strides = [1, 1]} : vector<132x32xbf16> to vector<128x32xbf16>
    %37 = vector.extract_strided_slice %12 {offsets = [1, 0], sizes = [128, 32], strides = [1, 1]} : vector<132x32xbf16> to vector<128x32xbf16>
    %38 = vector.extract_strided_slice %12 {offsets = [2, 0], sizes = [128, 32], strides = [1, 1]} : vector<132x32xbf16> to vector<128x32xbf16>
    %39 = vector.extract_strided_slice %12 {offsets = [3, 0], sizes = [128, 32], strides = [1, 1]} : vector<132x32xbf16> to vector<128x32xbf16>
    %40 = tpu.concatenate %36, %37, %38, %39 in 1 : vector<128x32xbf16>, vector<128x32xbf16>, vector<128x32xbf16>, vector<128x32xbf16> -> vector<128x128xbf16>
    %c0_18 = arith.constant 0 : index
    %c0_19 = arith.constant 0 : index
    %41 = vector.load %arg5[%c0_18, %c0_19] : memref<128x128xbf16, #tpu.memory_space<vmem>>, vector<128x128xbf16>
    %cst_20 = arith.constant dense<0.000000e+00> : vector<128x128xf32>
    %42 = tpu.matmul %40, %41, %cst_20 {dimension_numbers = #tpu.dot_dimension_numbers<[1], [0], [0], [1], [0, 0, 1, 1], [], []>} : vector<128x128xbf16>, vector<128x128xbf16>, vector<128x128xf32> -> vector<128x128xf32>
    %43 = vector.shape_cast %42 : vector<128x128xf32> to vector<8x16x128xf32>
    %44 = tpu.iota {dimensions = array<i32: 1>} : vector<8x16x128xi32>
    %c13_i32 = arith.constant 13 : i32
    %45 = vector.broadcast %c13_i32 : i32 to vector<8x16x128xi32>
    %46 = arith.cmpi slt, %44, %45 : vector<8x16x128xi32>
    %cst_21 = arith.constant -1.000000e+30 : f32
    %47 = vector.broadcast %cst_21 : f32 to vector<8x16x128xf32>
    %48 = arith.select %46, %43, %47 : vector<8x16x128xi1>, vector<8x16x128xf32>
    %cst_22 = arith.constant dense<0xFF800000> : vector<8x128xf32>
    %49 = vector.multi_reduction <maximumf>, %48, %cst_22 [1] : vector<8x16x128xf32> to vector<8x128xf32>
    %c0_23 = arith.constant 0 : index
    %c0_24 = arith.constant 0 : index
    %50 = vector.load %arg6[%c0_23, %c0_24] : memref<1x128xf32, #tpu.memory_space<vmem>>, vector<1x128xf32>
    %51 = vector.broadcast %50 : vector<1x128xf32> to vector<8x128xf32>
    %52 = arith.addf %49, %51 : vector<8x128xf32>
    %cst_25 = arith.constant 0.000000e+00 : f32
    %53 = vector.broadcast %cst_25 : f32 to vector<8x128xf32>
    %54 = arith.maximumf %52, %53 : vector<8x128xf32>
    %55 = arith.truncf %54 : vector<8x128xf32> to vector<8x128xbf16>
    %c0_26 = arith.constant 0 : index
    %c0_27 = arith.constant 0 : index
    %56 = vector.load %arg10[%c0_26, %c0_27] : memref<128x128xbf16, #tpu.memory_space<vmem>>, vector<128x128xbf16>
    %cst_28 = arith.constant dense<0.000000e+00> : vector<8x128xf32>
    %57 = tpu.matmul %55, %56, %cst_28 {dimension_numbers = #tpu.dot_dimension_numbers<[1], [0], [0], [1], [0, 0, 1, 1], [], []>} : vector<8x128xbf16>, vector<128x128xbf16>, vector<8x128xf32> -> vector<8x128xf32>
    %58 = arith.addf %35, %57 : vector<8x128xf32>
    %59 = vector.extract_strided_slice %12 {offsets = [0, 0], sizes = [128, 32], strides = [1, 1]} : vector<132x32xbf16> to vector<128x32xbf16>
    %60 = vector.extract_strided_slice %12 {offsets = [1, 0], sizes = [128, 32], strides = [1, 1]} : vector<132x32xbf16> to vector<128x32xbf16>
    %61 = vector.extract_strided_slice %12 {offsets = [2, 0], sizes = [128, 32], strides = [1, 1]} : vector<132x32xbf16> to vector<128x32xbf16>
    %62 = vector.extract_strided_slice %12 {offsets = [3, 0], sizes = [128, 32], strides = [1, 1]} : vector<132x32xbf16> to vector<128x32xbf16>
    %63 = vector.extract_strided_slice %12 {offsets = [4, 0], sizes = [128, 32], strides = [1, 1]} : vector<132x32xbf16> to vector<128x32xbf16>
    %64 = tpu.concatenate %59, %60, %61, %62, %63 in 1 : vector<128x32xbf16>, vector<128x32xbf16>, vector<128x32xbf16>, vector<128x32xbf16>, vector<128x32xbf16> -> vector<128x160xbf16>
    %c0_29 = arith.constant 0 : index
    %c0_30 = arith.constant 0 : index
    %65 = vector.load %arg7[%c0_29, %c0_30] : memref<160x128xbf16, #tpu.memory_space<vmem>>, vector<160x128xbf16>
    %cst_31 = arith.constant dense<0.000000e+00> : vector<128x128xf32>
    %66 = tpu.matmul %64, %65, %cst_31 {dimension_numbers = #tpu.dot_dimension_numbers<[1], [0], [0], [1], [0, 0, 1, 1], [], []>} : vector<128x160xbf16>, vector<160x128xbf16>, vector<128x128xf32> -> vector<128x128xf32>
    %67 = vector.shape_cast %66 : vector<128x128xf32> to vector<8x16x128xf32>
    %68 = tpu.iota {dimensions = array<i32: 1>} : vector<8x16x128xi32>
    %c12_i32 = arith.constant 12 : i32
    %69 = vector.broadcast %c12_i32 : i32 to vector<8x16x128xi32>
    %70 = arith.cmpi slt, %68, %69 : vector<8x16x128xi32>
    %cst_32 = arith.constant -1.000000e+30 : f32
    %71 = vector.broadcast %cst_32 : f32 to vector<8x16x128xf32>
    %72 = arith.select %70, %67, %71 : vector<8x16x128xi1>, vector<8x16x128xf32>
    %cst_33 = arith.constant dense<0xFF800000> : vector<8x128xf32>
    %73 = vector.multi_reduction <maximumf>, %72, %cst_33 [1] : vector<8x16x128xf32> to vector<8x128xf32>
    %c0_34 = arith.constant 0 : index
    %c0_35 = arith.constant 0 : index
    %74 = vector.load %arg8[%c0_34, %c0_35] : memref<1x128xf32, #tpu.memory_space<vmem>>, vector<1x128xf32>
    %75 = vector.broadcast %74 : vector<1x128xf32> to vector<8x128xf32>
    %76 = arith.addf %73, %75 : vector<8x128xf32>
    %cst_36 = arith.constant 0.000000e+00 : f32
    %77 = vector.broadcast %cst_36 : f32 to vector<8x128xf32>
    %78 = arith.maximumf %76, %77 : vector<8x128xf32>
    %79 = arith.truncf %78 : vector<8x128xf32> to vector<8x128xbf16>
    %c0_37 = arith.constant 0 : index
    %c0_38 = arith.constant 0 : index
    %80 = vector.load %arg11[%c0_37, %c0_38] : memref<128x128xbf16, #tpu.memory_space<vmem>>, vector<128x128xbf16>
    %cst_39 = arith.constant dense<0.000000e+00> : vector<8x128xf32>
    %81 = tpu.matmul %79, %80, %cst_39 {dimension_numbers = #tpu.dot_dimension_numbers<[1], [0], [0], [1], [0, 0, 1, 1], [], []>} : vector<8x128xbf16>, vector<128x128xbf16>, vector<8x128xf32> -> vector<8x128xf32>
    %82 = arith.addf %58, %81 : vector<8x128xf32>
    %c0_40 = arith.constant 0 : index
    %c0_41 = arith.constant 0 : index
    %83 = vector.load %arg12[%c0_40, %c0_41] : memref<1x128xf32, #tpu.memory_space<vmem>>, vector<1x128xf32>
    %84 = vector.broadcast %83 : vector<1x128xf32> to vector<8x128xf32>
    %85 = arith.addf %82, %84 : vector<8x128xf32>
    %c0_42 = arith.constant 0 : index
    %c0_43 = arith.constant 0 : index
    %86 = vector.load %arg13[%c0_42, %c0_43] : memref<8x128xf32, #tpu.memory_space<vmem>>, vector<8x128xf32>
    tpu.vector_store %arg13[%c0_42, %c0_43], %85 {strides = array<i32>} : memref<8x128xf32, #tpu.memory_space<vmem>>, vector<8x128xf32>,
    return
  }
  func.func @transform_0(%arg0: i32) -> (i32, i32) {
    %c0_i32 = arith.constant 0 : i32
    %c0_i32_0 = arith.constant 0 : i32
    return %arg0, %c0_i32 : i32, i32
  }
  func.func @transform_1(%arg0: i32) -> (i32, i32) {
    %c0_i32 = arith.constant 0 : i32
    %c0_i32_0 = arith.constant 0 : i32
    %c0_i32_1 = arith.constant 0 : i32
    return %c0_i32, %c0_i32_0 : i32, i32
  }
  func.func @transform_2(%arg0: i32) -> (i32, i32) {
    %c0_i32 = arith.constant 0 : i32
    %c0_i32_0 = arith.constant 0 : i32
    %c0_i32_1 = arith.constant 0 : i32
    return %c0_i32, %c0_i32_0 : i32, i32
  }
  func.func @transform_3(%arg0: i32) -> (i32, i32) {
    %c0_i32 = arith.constant 0 : i32
    %c0_i32_0 = arith.constant 0 : i32
    %c0_i32_1 = arith.constant 0 : i32
    return %c0_i32, %c0_i32_0 : i32, i32
  }
  func.func @transform_4(%arg0: i32) -> (i32, i32) {
    %c0_i32 = arith.constant 0 : i32
    %c0_i32_0 = arith.constant 0 : i32
    %c0_i32_1 = arith.constant 0 : i32
    return %c0_i32, %c0_i32_0 : i32, i32
  }
  func.func @transform_5(%arg0: i32) -> (i32, i32) {
    %c0_i32 = arith.constant 0 : i32
    %c0_i32_0 = arith.constant 0 : i32
    %c0_i32_1 = arith.constant 0 : i32
    return %c0_i32, %c0_i32_0 : i32, i32
  }
  func.func @transform_6(%arg0: i32) -> (i32, i32) {
    %c0_i32 = arith.constant 0 : i32
    %c0_i32_0 = arith.constant 0 : i32
    %c0_i32_1 = arith.constant 0 : i32
    return %c0_i32, %c0_i32_0 : i32, i32
  }
  func.func @transform_7(%arg0: i32) -> (i32, i32) {
    %c0_i32 = arith.constant 0 : i32
    %c0_i32_0 = arith.constant 0 : i32
    %c0_i32_1 = arith.constant 0 : i32
    return %c0_i32, %c0_i32_0 : i32, i32
  }
  func.func @transform_8(%arg0: i32) -> (i32, i32) {
    %c0_i32 = arith.constant 0 : i32
    %c0_i32_0 = arith.constant 0 : i32
    %c0_i32_1 = arith.constant 0 : i32
    return %c0_i32, %c0_i32_0 : i32, i32
  }
  func.func @transform_9(%arg0: i32) -> (i32, i32) {
    %c0_i32 = arith.constant 0 : i32
    %c0_i32_0 = arith.constant 0 : i32
    %c0_i32_1 = arith.constant 0 : i32
    return %c0_i32, %c0_i32_0 : i32, i32
  }
  func.func @transform_10(%arg0: i32) -> (i32, i32) {
    %c0_i32 = arith.constant 0 : i32
    %c0_i32_0 = arith.constant 0 : i32
    %c0_i32_1 = arith.constant 0 : i32
    return %c0_i32, %c0_i32_0 : i32, i32
  }
  func.func @transform_11(%arg0: i32) -> (i32, i32) {
    %c0_i32 = arith.constant 0 : i32
    %c0_i32_0 = arith.constant 0 : i32
    %c0_i32_1 = arith.constant 0 : i32
    return %c0_i32, %c0_i32_0 : i32, i32
  }
  func.func @transform_12(%arg0: i32) -> (i32, i32) {
    %c0_i32 = arith.constant 0 : i32
    %c0_i32_0 = arith.constant 0 : i32
    return %arg0, %c0_i32 : i32, i32
  }
}

</mosaic_0001>

<llo_original>
// kernel: tpu_custom_call.1
$region0: #{tpu_custom_call.1}
  #allocation0 [shape = 'u32[]', space=smem, size = 0x4, offset = 0x4, fixed_abs, tag = 'smem constant byte address 0x4 - core index']
  #allocation1 [shape = 'u32[144,128]{1,0:T(1,128)}', space=vmem, size = 0x12000, scoped, tag = 'internal scratch']
  %s0 = inlined_call_operand.vmem [shape: s32[128,1], index: 0, kind: input, shape index: {}]
  %s1 = inlined_call_operand.vmem [shape: bf16[128,32], index: 1, kind: input, shape index: {}]
  %s2 = inlined_call_operand.hbm [shape: bf16[96,128], index: 2, kind: input, shape index: {}]
  %s3 = inlined_call_operand.vmem [shape: f32[1,128], index: 3, kind: input, shape index: {}]
  %s4 = inlined_call_operand.vmem [shape: bf16[128,128], index: 4, kind: input, shape index: {}]
  %s5 = inlined_call_operand.vmem [shape: f32[1,128], index: 5, kind: input, shape index: {}]
  %s6 = inlined_call_operand.vmem [shape: bf16[160,128], index: 6, kind: input, shape index: {}]
  %s7 = inlined_call_operand.vmem [shape: f32[1,128], index: 7, kind: input, shape index: {}]
  %s8 = inlined_call_operand.vmem [shape: bf16[128,128], index: 8, kind: input, shape index: {}]
  %s9 = inlined_call_operand.hbm [shape: bf16[128,128], index: 9, kind: input, shape index: {}]
  %s10 = inlined_call_operand.hbm [shape: bf16[128,128], index: 10, kind: input, shape index: {}]
  %s11 = inlined_call_operand.vmem [shape: f32[1,128], index: 11, kind: input, shape index: {}]
  %s12 = inlined_call_operand.hbm [shape: f32[8,128], index: 12, kind: output, shape index: {}]
  %s13 = sld [smem:[#allocation0]]
  $region70: #{tpu_custom_call.1} parent=0
    _
  %s15 = ssub.s32 1, %s13
  %s16 = scalar_select 0, %s15, %s13
  $region1: #{tpu_custom_call.1} parent=0
    #allocation2 [shape = 'u8[24576]{0}', space=vmem, size = 0x6000, scoped, tag = 'input window, operand 2, single buffered']
    #allocation3 [shape = 's32[1]{0}', space=sflag, size = 0x4, scoped, tag = 'scoped memory for tpu_custom_call.1']
    #allocation4 [shape = 's32[1]{0}', space=sflag, size = 0x4, scoped, tag = 'scoped memory for tpu_custom_call.1']
    #allocation5 [shape = 'u8[32768]{0}', space=vmem, size = 0x8000, scoped, tag = 'input window, operand 9, single buffered']
    #allocation6 [shape = 's32[1]{0}', space=sflag, size = 0x4, scoped, tag = 'scoped memory for tpu_custom_call.1']
    #allocation7 [shape = 'u8[32768]{0}', space=vmem, size = 0x8000, scoped, tag = 'input window, operand 10, single buffered']
    #allocation8 [shape = 'u8[4096]{0}', space=vmem, size = 0x1000, scoped, tag = 'output window, operand 0, single buffered']
    %17 = vsyncpa [#allocation3], 0
    %18 = vsyncpa [#allocation6], 0
    %19 = vsyncpa [#allocation4], 0
    // Predicated region
    $region2: #{tpu_custom_call.1} parent=1 // pred_check
      _
    $region3: #{tpu_custom_call.1} parent=1 // pred_check_branch
      %21 = sbr.rel (0) target = $region5
    $region4: #{tpu_custom_call.1} parent=1 // pred_region
      _
    $region5: #{tpu_custom_call.1} parent=1 // pred_fallthru
      _
    // Predicated region
    $region6: #{tpu_custom_call.1} parent=1 // pred_check
      _
    $region7: #{tpu_custom_call.1} parent=1 // pred_check_branch
      %23 = sbr.rel (0) target = $region9
    $region8: #{tpu_custom_call.1} parent=1 // pred_region
      _
    $region9: #{tpu_custom_call.1} parent=1 // pred_fallthru
      _
    // Predicated region
    $region10: #{tpu_custom_call.1} parent=1 // pred_check
      _
    $region11: #{tpu_custom_call.1} parent=1 // pred_check_branch
      %25 = sbr.rel (0) target = $region13
    $region12: #{tpu_custom_call.1} parent=1 // pred_region
      %s27 = ssub.s32 768, 768
      %28 = vsyncadd [#allocation3], %s27
      %s29 = sshll.u32 [#allocation2], 4
      %s30 = int_to_ptr.vmem [resolvable:$true] %s29
      %35 = dma.hbm_to_vmem [thread:$0]  %s2, 768, %s30, [#allocation3], 64, 64, 4
    $region13: #{tpu_custom_call.1} parent=1 // pred_fallthru
      _
    // Predicated region
    $region14: #{tpu_custom_call.1} parent=1 // pred_check
      _
    $region15: #{tpu_custom_call.1} parent=1 // pred_check_branch
      %37 = sbr.rel (0) target = $region17
    $region16: #{tpu_custom_call.1} parent=1 // pred_region
      _
    $region17: #{tpu_custom_call.1} parent=1 // pred_fallthru
      _
    // Predicated region
    $region18: #{tpu_custom_call.1} parent=1 // pred_check
      _
    $region19: #{tpu_custom_call.1} parent=1 // pred_check_branch
      %39 = sbr.rel (0) target = $region21
    $region20: #{tpu_custom_call.1} parent=1 // pred_region
      _
    $region21: #{tpu_custom_call.1} parent=1 // pred_fallthru
      _
    // Predicated region
    $region22: #{tpu_custom_call.1} parent=1 // pred_check
      _
    $region23: #{tpu_custom_call.1} parent=1 // pred_check_branch
      %41 = sbr.rel (0) target = $region25
    $region24: #{tpu_custom_call.1} parent=1 // pred_region
      _
    $region25: #{tpu_custom_call.1} parent=1 // pred_fallthru
      _
    // Predicated region
    $region26: #{tpu_custom_call.1} parent=1 // pred_check
      _
    $region27: #{tpu_custom_call.1} parent=1 // pred_check_branch
      %43 = sbr.rel (0) target = $region29
    $region28: #{tpu_custom_call.1} parent=1 // pred_region
      _
    $region29: #{tpu_custom_call.1} parent=1 // pred_fallthru
      _
    // Predicated region
    $region30: #{tpu_custom_call.1} parent=1 // pred_check
      _
    $region31: #{tpu_custom_call.1} parent=1 // pred_check_branch
      %45 = sbr.rel (0) target = $region33
    $region32: #{tpu_custom_call.1} parent=1 // pred_region
      _
    $region33: #{tpu_custom_call.1} parent=1 // pred_fallthru
      _
    // Predicated region
    $region34: #{tpu_custom_call.1} parent=1 // pred_check
      _
    $region35: #{tpu_custom_call.1} parent=1 // pred_check_branch
      %47 = sbr.rel (0) target = $region37
    $region36: #{tpu_custom_call.1} parent=1 // pred_region
      _
    $region37: #{tpu_custom_call.1} parent=1 // pred_fallthru
      _
    // Predicated region
    $region38: #{tpu_custom_call.1} parent=1 // pred_check
      _
    $region39: #{tpu_custom_call.1} parent=1 // pred_check_branch
      %49 = sbr.rel (0) target = $region41
    $region40: #{tpu_custom_call.1} parent=1 // pred_region
      %s51 = ssub.s32 1024, 1024
      %52 = vsyncadd [#allocation6], %s51
      %s53 = sshll.u32 [#allocation5], 4
      %s54 = int_to_ptr.vmem [resolvable:$true] %s53
      %59 = dma.hbm_to_vmem [thread:$0]  %s9, 1024, %s54, [#allocation6], 64, 64, 4
    $region41: #{tpu_custom_call.1} parent=1 // pred_fallthru
      _
    // Predicated region
    $region42: #{tpu_custom_call.1} parent=1 // pred_check
      _
    $region43: #{tpu_custom_call.1} parent=1 // pred_check_branch
      %61 = sbr.rel (0) target = $region45
    $region44: #{tpu_custom_call.1} parent=1 // pred_region
      %s63 = ssub.s32 1024, 1024
      %64 = vsyncadd [#allocation6], %s63
      %s65 = sshll.u32 [#allocation7], 4
      %s66 = int_to_ptr.vmem [resolvable:$true] %s65
      %71 = dma.hbm_to_vmem [thread:$0]  %s10, 1024, %s66, [#allocation6], 64, 64, 4
    $region45: #{tpu_custom_call.1} parent=1 // pred_fallthru
      _
    // Predicated region
    $region46: #{tpu_custom_call.1} parent=1 // pred_check
      _
    $region47: #{tpu_custom_call.1} parent=1 // pred_check_branch
      %73 = sbr.rel (0) target = $region49
    $region48: #{tpu_custom_call.1} parent=1 // pred_region
      _
    $region49: #{tpu_custom_call.1} parent=1 // pred_fallthru
      _
    // Predicated region
    $region50: #{tpu_custom_call.1} parent=1 // pred_check
      _
    $region51: #{tpu_custom_call.1} parent=1 // pred_check_branch
      %75 = sbr.rel (0) target = $region53
    $region52: #{tpu_custom_call.1} parent=1 // pred_region
      %76 = dma.done [#allocation3], 768
    $region53: #{tpu_custom_call.1} parent=1 // pred_fallthru
      _
    // Predicated region
    $region54: #{tpu_custom_call.1} parent=1 // pred_check
      _
    $region55: #{tpu_custom_call.1} parent=1 // pred_check_branch
      %78 = sbr.rel (0) target = $region57
    $region56: #{tpu_custom_call.1} parent=1 // pred_region
      %79 = dma.done [#allocation6], 1024
    $region57: #{tpu_custom_call.1} parent=1 // pred_fallthru
      _
    // Predicated region
    $region58: #{tpu_custom_call.1} parent=1 // pred_check
      _
    $region59: #{tpu_custom_call.1} parent=1 // pred_check_branch
      %81 = sbr.rel (0) target = $region61
    $region60: #{tpu_custom_call.1} parent=1 // pred_region
      %82 = dma.done [#allocation6], 1024
    $region61: #{tpu_custom_call.1} parent=1 // pred_fallthru
      _
    %v84 = vld [vmem:[%s0] sm:$0xff]
    %v85 = vld [vmem:[%s0 + $0x8] sm:$0xff]
    %v86 = vld [vmem:[%s0 + $0x10] sm:$0xff]
    %v87 = vld [vmem:[%s0 + $0x18] sm:$0xff]
    %v88 = vld [vmem:[%s0 + $0x20] sm:$0xff]
    %v89 = vld [vmem:[%s0 + $0x28] sm:$0xff]
    %v90 = vld [vmem:[%s0 + $0x30] sm:$0xff]
    %v91 = vld [vmem:[%s0 + $0x38] sm:$0xff]
    %v92 = vld [vmem:[%s0 + $0x40] sm:$0xff]
    %v93 = vld [vmem:[%s0 + $0x48] sm:$0xff]
    %v94 = vld [vmem:[%s0 + $0x50] sm:$0xff]
    %v95 = vld [vmem:[%s0 + $0x58] sm:$0xff]
    %v96 = vld [vmem:[%s0 + $0x60] sm:$0xff]
    %v97 = vld [vmem:[%s0 + $0x68] sm:$0xff]
    %v98 = vld [vmem:[%s0 + $0x70] sm:$0xff]
    %v99 = vld [vmem:[%s0 + $0x78] sm:$0xff]
    %v100 = vlaneseq
    %v101 = vand.u32 %v100, 127
    %102 = vset.pattern.permute.xlu0 0
    %103 = vperm.xlu0 %102, %v84
    %v104 = vpop.permute.xlu0 %103
    %105 = vset.pattern.permute.xlu0 0
    %106 = vperm.xlu0 %105, %v85
    %v107 = vpop.permute.xlu0 %106
    %108 = vset.pattern.permute.xlu0 0
    %109 = vperm.xlu0 %108, %v86
    %v110 = vpop.permute.xlu0 %109
    %111 = vset.pattern.permute.xlu0 0
    %112 = vperm.xlu0 %111, %v87
    %v113 = vpop.permute.xlu0 %112
    %114 = vset.pattern.permute.xlu0 0
    %115 = vperm.xlu0 %114, %v88
    %v116 = vpop.permute.xlu0 %115
    %117 = vset.pattern.permute.xlu0 0
    %118 = vperm.xlu0 %117, %v89
    %v119 = vpop.permute.xlu0 %118
    %120 = vset.pattern.permute.xlu0 0
    %121 = vperm.xlu0 %120, %v90
    %v122 = vpop.permute.xlu0 %121
    %123 = vset.pattern.permute.xlu0 0
    %124 = vperm.xlu0 %123, %v91
    %v125 = vpop.permute.xlu0 %124
    %126 = vset.pattern.permute.xlu0 0
    %127 = vperm.xlu0 %126, %v92
    %v128 = vpop.permute.xlu0 %127
    %129 = vset.pattern.permute.xlu0 0
    %130 = vperm.xlu0 %129, %v93
    %v131 = vpop.permute.xlu0 %130
    %132 = vset.pattern.permute.xlu0 0
    %133 = vperm.xlu0 %132, %v94
    %v134 = vpop.permute.xlu0 %133
    %135 = vset.pattern.permute.xlu0 0
    %136 = vperm.xlu0 %135, %v95
    %v137 = vpop.permute.xlu0 %136
    %138 = vset.pattern.permute.xlu0 0
    %139 = vperm.xlu0 %138, %v96
    %v140 = vpop.permute.xlu0 %139
    %141 = vset.pattern.permute.xlu0 0
    %142 = vperm.xlu0 %141, %v97
    %v143 = vpop.permute.xlu0 %142
    %144 = vset.pattern.permute.xlu0 0
    %145 = vperm.xlu0 %144, %v98
    %v146 = vpop.permute.xlu0 %145
    %147 = vset.pattern.permute.xlu0 0
    %148 = vperm.xlu0 %147, %v99
    %v149 = vpop.permute.xlu0 %148
    %vm150 = vcmp.eq.s32.totalorder %v104, %v101
    %vm151 = vcmp.eq.s32.totalorder %v107, %v101
    %vm152 = vcmp.eq.s32.totalorder %v110, %v101
    %vm153 = vcmp.eq.s32.totalorder %v113, %v101
    %vm154 = vcmp.eq.s32.totalorder %v116, %v101
    %vm155 = vcmp.eq.s32.totalorder %v119, %v101
    %vm156 = vcmp.eq.s32.totalorder %v122, %v101
    %vm157 = vcmp.eq.s32.totalorder %v125, %v101
    %vm158 = vcmp.eq.s32.totalorder %v128, %v101
    %vm159 = vcmp.eq.s32.totalorder %v131, %v101
    %vm160 = vcmp.eq.s32.totalorder %v134, %v101
    %vm161 = vcmp.eq.s32.totalorder %v137, %v101
    %vm162 = vcmp.eq.s32.totalorder %v140, %v101
    %vm163 = vcmp.eq.s32.totalorder %v143, %v101
    %vm164 = vcmp.eq.s32.totalorder %v146, %v101
    %vm165 = vcmp.eq.s32.totalorder %v149, %v101
    %v166 = vsel %vm150, 1.0, 0.0
    %v167 = vsel %vm151, 1.0, 0.0
    %v168 = vsel %vm152, 1.0, 0.0
    %v169 = vsel %vm153, 1.0, 0.0
    %v170 = vsel %vm154, 1.0, 0.0
    %v171 = vsel %vm155, 1.0, 0.0
    %v172 = vsel %vm156, 1.0, 0.0
    %v173 = vsel %vm157, 1.0, 0.0
    %v174 = vsel %vm158, 1.0, 0.0
    %v175 = vsel %vm159, 1.0, 0.0
    %v176 = vsel %vm160, 1.0, 0.0
    %v177 = vsel %vm161, 1.0, 0.0
    %v178 = vsel %vm162, 1.0, 0.0
    %v179 = vsel %vm163, 1.0, 0.0
    %v180 = vsel %vm164, 1.0, 0.0
    %v181 = vsel %vm165, 1.0, 0.0
    %v182 = vpack.c.bf16 %v167, %v166
    %v183 = vpack.c.bf16 %v169, %v168
    %v184 = vpack.c.bf16 %v171, %v170
    %v185 = vpack.c.bf16 %v173, %v172
    %v186 = vpack.c.bf16 %v175, %v174
    %v187 = vpack.c.bf16 %v177, %v176
    %v188 = vpack.c.bf16 %v179, %v178
    %v189 = vpack.c.bf16 %v181, %v180
    %v190 = vld [vmem:[%s1] sm:$0xf]
    %v191 = vld [vmem:[%s1 + $0x4] sm:$0xf]
    %v192 = vld [vmem:[%s1 + $0x8] sm:$0xf]
    %v193 = vld [vmem:[%s1 + $0xc] sm:$0xf]
    %v194 = vld [vmem:[%s1 + $0x10] sm:$0xf]
    %v195 = vld [vmem:[%s1 + $0x14] sm:$0xf]
    %v196 = vld [vmem:[%s1 + $0x18] sm:$0xf]
    %v197 = vld [vmem:[%s1 + $0x1c] sm:$0xf]
    %v198 = vld [vmem:[%s1 + $0x20] sm:$0xf]
    %v199 = vld [vmem:[%s1 + $0x24] sm:$0xf]
    %v200 = vld [vmem:[%s1 + $0x28] sm:$0xf]
    %v201 = vld [vmem:[%s1 + $0x2c] sm:$0xf]
    %v202 = vld [vmem:[%s1 + $0x30] sm:$0xf]
    %v203 = vld [vmem:[%s1 + $0x34] sm:$0xf]
    %v204 = vld [vmem:[%s1 + $0x38] sm:$0xf]
    %v205 = vld [vmem:[%s1 + $0x3c] sm:$0xf]
    %v222 = vunpack.c.l.b16 %v190
    %v223 = vunpack.c.l.b16 %v191
    %v224 = vunpack.c.l.b16 %v192
    %v225 = vunpack.c.l.b16 %v193
    %v226 = vunpack.c.l.b16 %v194
    %v227 = vunpack.c.l.b16 %v195
    %v228 = vunpack.c.l.b16 %v196
    %v229 = vunpack.c.l.b16 %v197
    %v230 = vunpack.c.l.b16 %v198
    %v231 = vunpack.c.l.b16 %v199
    %v232 = vunpack.c.l.b16 %v200
    %v233 = vunpack.c.l.b16 %v201
    %v234 = vunpack.c.l.b16 %v202
    %v235 = vunpack.c.l.b16 %v203
    %v236 = vunpack.c.l.b16 %v204
    %v237 = vunpack.c.l.b16 %v205
    %v238 = vpack.c.b16 %v223, %v222
    %v239 = vpack.c.b16 %v225, %v224
    %v240 = vpack.c.b16 %v227, %v226
    %v241 = vpack.c.b16 %v229, %v228
    %v242 = vpack.c.b16 %v231, %v230
    %v243 = vpack.c.b16 %v233, %v232
    %v244 = vpack.c.b16 %v235, %v234
    %v245 = vpack.c.b16 %v237, %v236
    %254 = vmatprep.subr.bf16.mxu0 0
    %255 = vmatpush1.bf16.msra.mxu0 %v238
    %256 = vmatprep.subr.bf16.mxu0 0
    %257 = vmatpush1.bf16.msra.mxu0 %v239
    %258 = vmatprep.subr.bf16.mxu0 0
    %259 = vmatpush1.bf16.msra.mxu0 %v240
    %260 = vmatprep.subr.bf16.mxu0 0
    %261 = vmatpush1.bf16.msra.mxu0 %v241
    %262 = vmatprep.subr.bf16.mxu0 0
    %263 = vmatpush1.bf16.msra.mxu0 %v242
    %264 = vmatprep.subr.bf16.mxu0 0
    %265 = vmatpush1.bf16.msra.mxu0 %v243
    %266 = vmatprep.subr.bf16.mxu0 0
    %267 = vmatpush1.bf16.msra.mxu0 %v244
    %268 = vmatprep.subr.bf16.mxu0 0
    %269 = vmatpush1.bf16.msra.mxu0 %v245
    %270 = vmatprep.subr.bf16.mxu0 0
    %271 = vmatpush1.bf16.msra.mxu0 0
    %272 = vmatprep.subr.bf16.mxu0 0
    %273 = vmatpush1.bf16.msra.mxu0 0
    %274 = vmatprep.subr.bf16.mxu0 0
    %275 = vmatpush1.bf16.msra.mxu0 0
    %276 = vmatprep.subr.bf16.mxu0 0
    %277 = vmatpush1.bf16.msra.mxu0 0
    %278 = vmatprep.subr.bf16.mxu0 0
    %279 = vmatpush1.bf16.msra.mxu0 0
    %280 = vmatprep.subr.bf16.mxu0 0
    %281 = vmatpush1.bf16.msra.mxu0 0
    %282 = vmatprep.subr.bf16.mxu0 0
    %283 = vmatpush1.bf16.msra.mxu0 0
    %284 = vmatprep.subr.bf16.mxu0 0
    %285 = vmatpush1.bf16.msra.mxu0 0
    %286 = vmatprep.mubr.bf16.mxu0 0
    %287 = vmatmul.mubr.bf16.gmra.mrb[0].mxu0 %v182
    %v288 = vpop.f32.mrb[0].mxu0
    %v289 = vadd.f32 0.0, %v288
    %v290 = vpop.f32.mrb[0].mxu0
    %v291 = vpop.f32.mrb[0].mxu0
    %v292 = vadd.f32 0.0, %v291
    %v293 = vpop.f32.mrb[0].mxu0
    %294 = vmatprep.mubr.bf16.mxu0 0
    %295 = vmatmul.mubr.bf16.gmra.mrb[0].mxu0 %v183
    %v296 = vpop.f32.mrb[0].mxu0
    %v297 = vadd.f32 0.0, %v296
    %v298 = vpop.f32.mrb[0].mxu0
    %v299 = vpop.f32.mrb[0].mxu0
    %v300 = vadd.f32 0.0, %v299
    %v301 = vpop.f32.mrb[0].mxu0
    %302 = vmatprep.mubr.bf16.mxu0 0
    %303 = vmatmul.mubr.bf16.gmra.mrb[0].mxu0 %v184
    %v304 = vpop.f32.mrb[0].mxu0
    %v305 = vadd.f32 0.0, %v304
    %v306 = vpop.f32.mrb[0].mxu0
    %v307 = vpop.f32.mrb[0].mxu0
    %v308 = vadd.f32 0.0, %v307
    %v309 = vpop.f32.mrb[0].mxu0
    %310 = vmatprep.mubr.bf16.mxu0 0
    %311 = vmatmul.mubr.bf16.gmra.mrb[0].mxu0 %v185
    %v312 = vpop.f32.mrb[0].mxu0
    %v313 = vadd.f32 0.0, %v312
    %v314 = vpop.f32.mrb[0].mxu0
    %v315 = vpop.f32.mrb[0].mxu0
    %v316 = vadd.f32 0.0, %v315
    %v317 = vpop.f32.mrb[0].mxu0
    %318 = vmatprep.mubr.bf16.mxu0 0
    %319 = vmatmul.mubr.bf16.gmra.mrb[0].mxu0 %v186
    %v320 = vpop.f32.mrb[0].mxu0
    %v321 = vadd.f32 0.0, %v320
    %v322 = vpop.f32.mrb[0].mxu0
    %v323 = vpop.f32.mrb[0].mxu0
    %v324 = vadd.f32 0.0, %v323
    %v325 = vpop.f32.mrb[0].mxu0
    %326 = vmatprep.mubr.bf16.mxu0 0
    %327 = vmatmul.mubr.bf16.gmra.mrb[0].mxu0 %v187
    %v328 = vpop.f32.mrb[0].mxu0
    %v329 = vadd.f32 0.0, %v328
    %v330 = vpop.f32.mrb[0].mxu0
    %v331 = vpop.f32.mrb[0].mxu0
    %v332 = vadd.f32 0.0, %v331
    %v333 = vpop.f32.mrb[0].mxu0
    %334 = vmatprep.mubr.bf16.mxu0 0
    %335 = vmatmul.mubr.bf16.gmra.mrb[0].mxu0 %v188
    %v336 = vpop.f32.mrb[0].mxu0
    %v337 = vadd.f32 0.0, %v336
    %v338 = vpop.f32.mrb[0].mxu0
    %v339 = vpop.f32.mrb[0].mxu0
    %v340 = vadd.f32 0.0, %v339
    %v341 = vpop.f32.mrb[0].mxu0
    %342 = vmatprep.mubr.bf16.mxu0 0
    %343 = vmatmul.mubr.bf16.gmra.mrb[0].mxu0 %v189
    %v344 = vpop.f32.mrb[0].mxu0
    %v345 = vadd.f32 0.0, %v344
    %v346 = vpop.f32.mrb[0].mxu0
    %v347 = vpop.f32.mrb[0].mxu0
    %v348 = vadd.f32 0.0, %v347
    %v349 = vpop.f32.mrb[0].mxu0
    %350 = vdwg.mxu0
    %v351 = vpack.c.bf16 %v292, %v289
    %v352 = vpack.c.bf16 %v300, %v297
    %v353 = vpack.c.bf16 %v308, %v305
    %v354 = vpack.c.bf16 %v316, %v313
    %v355 = vpack.c.bf16 %v324, %v321
    %v356 = vpack.c.bf16 %v332, %v329
    %v357 = vpack.c.bf16 %v340, %v337
    %v358 = vpack.c.bf16 %v348, %v345
    %vm359 = vsmask.f32 7424
    %v361 = vshrl.u32 %v351, 16
    %v363 = vshll.u32 %v351, 16
    %v365 = vrot.slane %v363, 1
    %v366 = vor.u32 %v361, %v365
    %v368 = vshll.u32 %v352, 16
    %v370 = vrot.slane %v368, 1
    %v371 = vsel %vm359, %v366, %v370
    %v372 = vshrl.u32 %v352, 16
    %v374 = vor.u32 %v372, %v370
    %v376 = vshll.u32 %v353, 16
    %v378 = vrot.slane %v376, 1
    %v379 = vsel %vm359, %v374, %v378
    %v380 = vshrl.u32 %v353, 16
    %v382 = vor.u32 %v380, %v378
    %v384 = vshll.u32 %v354, 16
    %v386 = vrot.slane %v384, 1
    %v387 = vsel %vm359, %v382, %v386
    %v388 = vshrl.u32 %v354, 16
    %v390 = vor.u32 %v388, %v386
    %v392 = vshll.u32 %v355, 16
    %v394 = vrot.slane %v392, 1
    %v395 = vsel %vm359, %v390, %v394
    %v396 = vshrl.u32 %v355, 16
    %v398 = vor.u32 %v396, %v394
    %v400 = vshll.u32 %v356, 16
    %v402 = vrot.slane %v400, 1
    %v403 = vsel %vm359, %v398, %v402
    %v404 = vshrl.u32 %v356, 16
    %v406 = vor.u32 %v404, %v402
    %v408 = vshll.u32 %v357, 16
    %v410 = vrot.slane %v408, 1
    %v411 = vsel %vm359, %v406, %v410
    %v412 = vshrl.u32 %v357, 16
    %v414 = vor.u32 %v412, %v410
    %v416 = vshll.u32 %v358, 16
    %v418 = vrot.slane %v416, 1
    %v419 = vsel %vm359, %v414, %v418
    %v420 = vshrl.u32 %v358, 16
    %v422 = vor.u32 %v420, %v418
    %v424 = vshll.u32 0, 16
    %v426 = vrot.slane %v424, 1
    %v427 = vsel %vm359, %v422, %v426
    %428 = vrot.lane.b32.xlu0 %v371, 32
    %v429 = vpop.permute.xlu0 %428
    %430 = vrot.lane.b32.xlu0 %v379, 32
    %v431 = vpop.permute.xlu0 %430
    %432 = vrot.lane.b32.xlu0 %v387, 32
    %v433 = vpop.permute.xlu0 %432
    %434 = vrot.lane.b32.xlu0 %v395, 32
    %v435 = vpop.permute.xlu0 %434
    %436 = vrot.lane.b32.xlu0 %v403, 32
    %v437 = vpop.permute.xlu0 %436
    %438 = vrot.lane.b32.xlu0 %v411, 32
    %v439 = vpop.permute.xlu0 %438
    %440 = vrot.lane.b32.xlu0 %v419, 32
    %v441 = vpop.permute.xlu0 %440
    %442 = vrot.lane.b32.xlu0 %v427, 32
    %v443 = vpop.permute.xlu0 %442
    %vm453 = vcmask 1046528
    %v454 = vrot.slane %v351, 1
    %v455 = vrot.slane %v352, 1
    %v456 = vsel %vm453, %v454, %v455
    %v457 = vrot.slane %v353, 1
    %v458 = vsel %vm453, %v455, %v457
    %v459 = vrot.slane %v354, 1
    %v460 = vsel %vm453, %v457, %v459
    %v461 = vrot.slane %v355, 1
    %v462 = vsel %vm453, %v459, %v461
    %v463 = vrot.slane %v356, 1
    %v464 = vsel %vm453, %v461, %v463
    %v465 = vrot.slane %v357, 1
    %v466 = vsel %vm453, %v463, %v465
    %v467 = vrot.slane %v358, 1
    %v468 = vsel %vm453, %v465, %v467
    %v469 = vrot.slane 0, 1
    %v470 = vsel %vm453, %v467, %v469
    %471 = vrot.lane.b32.xlu0 %v456, 64
    %v472 = vpop.permute.xlu0 %471
    %473 = vrot.lane.b32.xlu0 %v458, 64
    %v474 = vpop.permute.xlu0 %473
    %475 = vrot.lane.b32.xlu0 %v460, 64
    %v476 = vpop.permute.xlu0 %475
    %477 = vrot.lane.b32.xlu0 %v462, 64
    %v478 = vpop.permute.xlu0 %477
    %479 = vrot.lane.b32.xlu0 %v464, 64
    %v480 = vpop.permute.xlu0 %479
    %481 = vrot.lane.b32.xlu0 %v466, 64
    %v482 = vpop.permute.xlu0 %481
    %483 = vrot.lane.b32.xlu0 %v468, 64
    %v484 = vpop.permute.xlu0 %483
    %485 = vrot.lane.b32.xlu0 %v470, 64
    %v486 = vpop.permute.xlu0 %485
    %vm487 = vcmask 261120
    %v489 = vsel %vm487, %v351, %v429
    %v491 = vsel %vm487, %v352, %v431
    %v493 = vsel %vm487, %v353, %v433
    %v495 = vsel %vm487, %v354, %v435
    %v497 = vsel %vm487, %v355, %v437
    %v499 = vsel %vm487, %v356, %v439
    %v501 = vsel %vm487, %v357, %v441
    %v503 = vsel %vm487, %v358, %v443
    %vm504 = vcmask 523264
    %v506 = vsel %vm504, %v489, %v472
    %v508 = vsel %vm504, %v491, %v474
    %v510 = vsel %vm504, %v493, %v476
    %v512 = vsel %vm504, %v495, %v478
    %v514 = vsel %vm504, %v497, %v480
    %v516 = vsel %vm504, %v499, %v482
    %v518 = vsel %vm504, %v501, %v484
    %v520 = vsel %vm504, %v503, %v486
    %v521 = vld [vmem:[#allocation2] sm:$0xf]
    %v522 = vld [vmem:[#allocation2 + $0x4] sm:$0xf]
    %v523 = vld [vmem:[#allocation2 + $0x8] sm:$0xf]
    %v524 = vld [vmem:[#allocation2 + $0xc] sm:$0xf]
    %v525 = vld [vmem:[#allocation2 + $0x10] sm:$0xf]
    %v526 = vld [vmem:[#allocation2 + $0x14] sm:$0xf]
    %v527 = vld [vmem:[#allocation2 + $0x18] sm:$0xf]
    %v528 = vld [vmem:[#allocation2 + $0x1c] sm:$0xf]
    %v529 = vld [vmem:[#allocation2 + $0x20] sm:$0xf]
    %v530 = vld [vmem:[#allocation2 + $0x24] sm:$0xf]
    %v531 = vld [vmem:[#allocation2 + $0x28] sm:$0xf]
    %v532 = vld [vmem:[#allocation2 + $0x2c] sm:$0xf]
    %v545 = vunpack.c.l.b16 %v521
    %v546 = vunpack.c.l.b16 %v522
    %v547 = vunpack.c.l.b16 %v523
    %v548 = vunpack.c.l.b16 %v524
    %v549 = vunpack.c.l.b16 %v525
    %v550 = vunpack.c.l.b16 %v526
    %v551 = vunpack.c.l.b16 %v527
    %v552 = vunpack.c.l.b16 %v528
    %v553 = vunpack.c.l.b16 %v529
    %v554 = vunpack.c.l.b16 %v530
    %v555 = vunpack.c.l.b16 %v531
    %v556 = vunpack.c.l.b16 %v532
    %v557 = vpack.c.b16 %v546, %v545
    %v558 = vpack.c.b16 %v548, %v547
    %v559 = vpack.c.b16 %v550, %v549
    %v560 = vpack.c.b16 %v552, %v551
    %v561 = vpack.c.b16 %v554, %v553
    %v562 = vpack.c.b16 %v556, %v555
    %vm569 = vcmask 785408
    %v570 = vsel %vm569, %v506, 0
    %v572 = vsel %vm569, %v508, 0
    %v574 = vsel %vm569, %v510, 0
    %v576 = vsel %vm569, %v512, 0
    %v578 = vsel %vm569, %v514, 0
    %v580 = vsel %vm569, %v516, 0
    %v582 = vsel %vm569, %v518, 0
    %v584 = vsel %vm569, %v520, 0
    %586 = vmatprep.subr.bf16.mxu0 0
    %587 = vmatpush1.bf16.msra.mxu0 %v557
    %588 = vmatprep.subr.bf16.mxu0 0
    %589 = vmatpush1.bf16.msra.mxu0 %v558
    %590 = vmatprep.subr.bf16.mxu0 0
    %591 = vmatpush1.bf16.msra.mxu0 %v559
    %592 = vmatprep.subr.bf16.mxu0 0
    %593 = vmatpush1.bf16.msra.mxu0 %v560
    %594 = vmatprep.subr.bf16.mxu0 0
    %595 = vmatpush1.bf16.msra.mxu0 %v561
    %596 = vmatprep.subr.bf16.mxu0 0
    %597 = vmatpush1.bf16.msra.mxu0 %v562
    %598 = vmatprep.subr.bf16.mxu0 0
    %599 = vmatpush1.bf16.msra.mxu0 0
    %600 = vmatprep.subr.bf16.mxu0 0
    %601 = vmatpush1.bf16.msra.mxu0 0
    %602 = vmatprep.subr.bf16.mxu0 0
    %603 = vmatpush1.bf16.msra.mxu0 0
    %604 = vmatprep.subr.bf16.mxu0 0
    %605 = vmatpush1.bf16.msra.mxu0 0
    %606 = vmatprep.subr.bf16.mxu0 0
    %607 = vmatpush1.bf16.msra.mxu0 0
    %608 = vmatprep.subr.bf16.mxu0 0
    %609 = vmatpush1.bf16.msra.mxu0 0
    %610 = vmatprep.subr.bf16.mxu0 0
    %611 = vmatpush1.bf16.msra.mxu0 0
    %612 = vmatprep.subr.bf16.mxu0 0
    %613 = vmatpush1.bf16.msra.mxu0 0
    %614 = vmatprep.subr.bf16.mxu0 0
    %615 = vmatpush1.bf16.msra.mxu0 0
    %616 = vmatprep.subr.bf16.mxu0 0
    %617 = vmatpush1.bf16.msra.mxu0 0
    %618 = vmatprep.mubr.bf16.mxu0 0
    %619 = vmatmul.mubr.bf16.gmra.mrb[0].mxu0 %v570
    %v620 = vpop.f32.mrb[0].mxu0
    %v621 = vadd.f32 0.0, %v620
    %v622 = vpop.f32.mrb[0].mxu0
    %v623 = vpop.f32.mrb[0].mxu0
    %v624 = vadd.f32 0.0, %v623
    %v625 = vpop.f32.mrb[0].mxu0
    %626 = vmatprep.mubr.bf16.mxu0 0
    %627 = vmatmul.mubr.bf16.gmra.mrb[0].mxu0 %v572
    %v628 = vpop.f32.mrb[0].mxu0
    %v629 = vadd.f32 0.0, %v628
    %v630 = vpop.f32.mrb[0].mxu0
    %v631 = vpop.f32.mrb[0].mxu0
    %v632 = vadd.f32 0.0, %v631
    %v633 = vpop.f32.mrb[0].mxu0
    %634 = vmatprep.mubr.bf16.mxu0 0
    %635 = vmatmul.mubr.bf16.gmra.mrb[0].mxu0 %v574
    %v636 = vpop.f32.mrb[0].mxu0
    %v637 = vadd.f32 0.0, %v636
    %v638 = vpop.f32.mrb[0].mxu0
    %v639 = vpop.f32.mrb[0].mxu0
    %v640 = vadd.f32 0.0, %v639
    %v641 = vpop.f32.mrb[0].mxu0
    %642 = vmatprep.mubr.bf16.mxu0 0
    %643 = vmatmul.mubr.bf16.gmra.mrb[0].mxu0 %v576
    %v644 = vpop.f32.mrb[0].mxu0
    %v645 = vadd.f32 0.0, %v644
    %v646 = vpop.f32.mrb[0].mxu0
    %v647 = vpop.f32.mrb[0].mxu0
    %v648 = vadd.f32 0.0, %v647
    %v649 = vpop.f32.mrb[0].mxu0
    %650 = vmatprep.mubr.bf16.mxu0 0
    %651 = vmatmul.mubr.bf16.gmra.mrb[0].mxu0 %v578
    %v652 = vpop.f32.mrb[0].mxu0
    %v653 = vadd.f32 0.0, %v652
    %v654 = vpop.f32.mrb[0].mxu0
    %v655 = vpop.f32.mrb[0].mxu0
    %v656 = vadd.f32 0.0, %v655
    %v657 = vpop.f32.mrb[0].mxu0
    %658 = vmatprep.mubr.bf16.mxu0 0
    %659 = vmatmul.mubr.bf16.gmra.mrb[0].mxu0 %v580
    %v660 = vpop.f32.mrb[0].mxu0
    %v661 = vadd.f32 0.0, %v660
    %v662 = vpop.f32.mrb[0].mxu0
    %v663 = vpop.f32.mrb[0].mxu0
    %v664 = vadd.f32 0.0, %v663
    %v665 = vpop.f32.mrb[0].mxu0
    %666 = vmatprep.mubr.bf16.mxu0 0
    %667 = vmatmul.mubr.bf16.gmra.mrb[0].mxu0 %v582
    %v668 = vpop.f32.mrb[0].mxu0
    %v669 = vadd.f32 0.0, %v668
    %v670 = vpop.f32.mrb[0].mxu0
    %v671 = vpop.f32.mrb[0].mxu0
    %v672 = vadd.f32 0.0, %v671
    %v673 = vpop.f32.mrb[0].mxu0
    %674 = vmatprep.mubr.bf16.mxu0 0
    %675 = vmatmul.mubr.bf16.gmra.mrb[0].mxu0 %v584
    %v676 = vpop.f32.mrb[0].mxu0
    %v677 = vadd.f32 0.0, %v676
    %v678 = vpop.f32.mrb[0].mxu0
    %v679 = vpop.f32.mrb[0].mxu0
    %v680 = vadd.f32 0.0, %v679
    %v681 = vpop.f32.mrb[0].mxu0
    %682 = vdwg.mxu0
    %v683 = vlaneseq
    %v684 = vshrl.u32 %v683, 7
    %v685 = vadd.s32 %v684, 8
    %vm686 = vcmp.lt.s32.totalorder %v684, 14
    %vm687 = vcmp.lt.s32.totalorder %v685, 14
    %v688 = vsel %vm686, %v621, -1e+30
    %v689 = vsel %vm687, %v624, -1e+30
    %v690 = vsel %vm686, %v629, -1e+30
    %v691 = vsel %vm687, %v632, -1e+30
    %v692 = vsel %vm686, %v637, -1e+30
    %v693 = vsel %vm687, %v640, -1e+30
    %v694 = vsel %vm686, %v645, -1e+30
    %v695 = vsel %vm687, %v648, -1e+30
    %v696 = vsel %vm686, %v653, -1e+30
    %v697 = vsel %vm687, %v656, -1e+30
    %v698 = vsel %vm686, %v661, -1e+30
    %v699 = vsel %vm687, %v664, -1e+30
    %v700 = vsel %vm686, %v669, -1e+30
    %v701 = vsel %vm687, %v672, -1e+30
    %v702 = vsel %vm686, %v677, -1e+30
    %v703 = vsel %vm687, %v680, -1e+30
    %v704 = vmax.f32 %v688, %v689
    %v705 = vrot.slane %v704, 4
    %v706 = vmax.f32 %v704, %v705
    %v707 = vrot.slane %v706, 2
    %v708 = vmax.f32 %v706, %v707
    %v709 = vrot.slane %v708, 1
    %v710 = vmax.f32 %v708, %v709
    %v711 = vmax.f32 %v690, %v691
    %v712 = vrot.slane %v711, 4
    %v713 = vmax.f32 %v711, %v712
    %v714 = vrot.slane %v713, 2
    %v715 = vmax.f32 %v713, %v714
    %v716 = vrot.slane %v715, 1
    %v717 = vmax.f32 %v715, %v716
    %v718 = vmax.f32 %v692, %v693
    %v719 = vrot.slane %v718, 4
    %v720 = vmax.f32 %v718, %v719
    %v721 = vrot.slane %v720, 2
    %v722 = vmax.f32 %v720, %v721
    %v723 = vrot.slane %v722, 1
    %v724 = vmax.f32 %v722, %v723
    %v725 = vmax.f32 %v694, %v695
    %v726 = vrot.slane %v725, 4
    %v727 = vmax.f32 %v725, %v726
    %v728 = vrot.slane %v727, 2
    %v729 = vmax.f32 %v727, %v728
    %v730 = vrot.slane %v729, 1
    %v731 = vmax.f32 %v729, %v730
    %v732 = vmax.f32 %v696, %v697
    %v733 = vrot.slane %v732, 4
    %v734 = vmax.f32 %v732, %v733
    %v735 = vrot.slane %v734, 2
    %v736 = vmax.f32 %v734, %v735
    %v737 = vrot.slane %v736, 1
    %v738 = vmax.f32 %v736, %v737
    %v739 = vmax.f32 %v698, %v699
    %v740 = vrot.slane %v739, 4
    %v741 = vmax.f32 %v739, %v740
    %v742 = vrot.slane %v741, 2
    %v743 = vmax.f32 %v741, %v742
    %v744 = vrot.slane %v743, 1
    %v745 = vmax.f32 %v743, %v744
    %v746 = vmax.f32 %v700, %v701
    %v747 = vrot.slane %v746, 4
    %v748 = vmax.f32 %v746, %v747
    %v749 = vrot.slane %v748, 2
    %v750 = vmax.f32 %v748, %v749
    %v751 = vrot.slane %v750, 1
    %v752 = vmax.f32 %v750, %v751
    %v753 = vmax.f32 %v702, %v703
    %v754 = vrot.slane %v753, 4
    %v755 = vmax.f32 %v753, %v754
    %v756 = vrot.slane %v755, 2
    %v757 = vmax.f32 %v755, %v756
    %v758 = vrot.slane %v757, 1
    %v759 = vmax.f32 %v757, %v758
    %v760 = vld [vmem:[%s3] sm:$0x1]
    %v762 = vlaneseq
    %v763 = vshrl.u32 %v762, 7
    %v764 = vsub.s32 0, %v763
    %v765 = vrot.slane %v760, %v764
    %v767 = vadd.f32 %v710, %v765
    %v768 = vadd.f32 %v717, %v765
    %v769 = vadd.f32 %v724, %v765
    %v770 = vadd.f32 %v731, %v765
    %v771 = vadd.f32 %v738, %v765
    %v772 = vadd.f32 %v745, %v765
    %v773 = vadd.f32 %v752, %v765
    %v774 = vadd.f32 %v759, %v765
    %v775 = vmax.f32 %v767, 0.0
    %v776 = vmax.f32 %v768, 0.0
    %v777 = vmax.f32 %v769, 0.0
    %v778 = vmax.f32 %v770, 0.0
    %v779 = vmax.f32 %v771, 0.0
    %v780 = vmax.f32 %v772, 0.0
    %v781 = vmax.f32 %v773, 0.0
    %v782 = vmax.f32 %v774, 0.0
    %v783 = vpack.c.bf16 %v775, %v775
    %v784 = vpack.c.bf16 %v776, %v776
    %v785 = vpack.c.bf16 %v777, %v777
    %v786 = vpack.c.bf16 %v778, %v778
    %v787 = vpack.c.bf16 %v779, %v779
    %v788 = vpack.c.bf16 %v780, %v780
    %v789 = vpack.c.bf16 %v781, %v781
    %v790 = vpack.c.bf16 %v782, %v782
    %v791 = vld [vmem:[%s8] sm:$0xf]
    %v792 = vld [vmem:[%s8 + $0x4] sm:$0xf]
    %v793 = vld [vmem:[%s8 + $0x8] sm:$0xf]
    %v794 = vld [vmem:[%s8 + $0xc] sm:$0xf]
    %v795 = vld [vmem:[%s8 + $0x10] sm:$0xf]
    %v796 = vld [vmem:[%s8 + $0x14] sm:$0xf]
    %v797 = vld [vmem:[%s8 + $0x18] sm:$0xf]
    %v798 = vld [vmem:[%s8 + $0x1c] sm:$0xf]
    %v799 = vld [vmem:[%s8 + $0x20] sm:$0xf]
    %v800 = vld [vmem:[%s8 + $0x24] sm:$0xf]
    %v801 = vld [vmem:[%s8 + $0x28] sm:$0xf]
    %v802 = vld [vmem:[%s8 + $0x2c] sm:$0xf]
    %v803 = vld [vmem:[%s8 + $0x30] sm:$0xf]
    %v804 = vld [vmem:[%s8 + $0x34] sm:$0xf]
    %v805 = vld [vmem:[%s8 + $0x38] sm:$0xf]
    %v806 = vld [vmem:[%s8 + $0x3c] sm:$0xf]
    %vm807 = vsmask.f32 6400
    %v808 = vrot.slane %v361, 1
    %v809 = vrot.slane %v363, 2
    %v810 = vor.u32 %v808, %v809
    %v811 = vrot.slane %v372, 1
    %v812 = vrot.slane %v368, 2
    %v813 = vor.u32 %v811, %v812
    %v814 = vsel %vm807, %v810, %v813
    %v815 = vrot.slane %v380, 1
    %v816 = vrot.slane %v376, 2
    %v817 = vor.u32 %v815, %v816
    %v818 = vsel %vm807, %v813, %v817
    %v819 = vrot.slane %v388, 1
    %v820 = vrot.slane %v384, 2
    %v821 = vor.u32 %v819, %v820
    %v822 = vsel %vm807, %v817, %v821
    %v823 = vrot.slane %v396, 1
    %v824 = vrot.slane %v392, 2
    %v825 = vor.u32 %v823, %v824
    %v826 = vsel %vm807, %v821, %v825
    %v827 = vrot.slane %v404, 1
    %v828 = vrot.slane %v400, 2
    %v829 = vor.u32 %v827, %v828
    %v830 = vsel %vm807, %v825, %v829
    %v831 = vrot.slane %v412, 1
    %v832 = vrot.slane %v408, 2
    %v833 = vor.u32 %v831, %v832
    %v834 = vsel %vm807, %v829, %v833
    %v835 = vrot.slane %v420, 1
    %v836 = vrot.slane %v416, 2
    %v837 = vor.u32 %v835, %v836
    %v838 = vsel %vm807, %v833, %v837
    %v839 = vshrl.u32 0, 16
    %v841 = vrot.slane %v839, 1
    %v842 = vrot.slane %v424, 2
    %v843 = vor.u32 %v841, %v842
    %v844 = vsel %vm807, %v837, %v843
    %845 = vrot.lane.b32.xlu0 %v814, 96
    %v846 = vpop.permute.xlu0 %845
    %847 = vrot.lane.b32.xlu0 %v818, 96
    %v848 = vpop.permute.xlu0 %847
    %849 = vrot.lane.b32.xlu0 %v822, 96
    %v850 = vpop.permute.xlu0 %849
    %851 = vrot.lane.b32.xlu0 %v826, 96
    %v852 = vpop.permute.xlu0 %851
    %853 = vrot.lane.b32.xlu0 %v830, 96
    %v854 = vpop.permute.xlu0 %853
    %855 = vrot.lane.b32.xlu0 %v834, 96
    %v856 = vpop.permute.xlu0 %855
    %857 = vrot.lane.b32.xlu0 %v838, 96
    %v858 = vpop.permute.xlu0 %857
    %859 = vrot.lane.b32.xlu0 %v844, 96
    %v860 = vpop.permute.xlu0 %859
    %v862 = vsel %vm569, %v506, %v846
    %v865 = vsel %vm569, %v508, %v848
    %v868 = vsel %vm569, %v510, %v850
    %v871 = vsel %vm569, %v512, %v852
    %v874 = vsel %vm569, %v514, %v854
    %v877 = vsel %vm569, %v516, %v856
    %v880 = vsel %vm569, %v518, %v858
    %v883 = vsel %vm569, %v520, %v860
    %v885 = vld [vmem:[%s4] sm:$0xf]
    %v886 = vld [vmem:[%s4 + $0x4] sm:$0xf]
    %v887 = vld [vmem:[%s4 + $0x8] sm:$0xf]
    %v888 = vld [vmem:[%s4 + $0xc] sm:$0xf]
    %v889 = vld [vmem:[%s4 + $0x10] sm:$0xf]
    %v890 = vld [vmem:[%s4 + $0x14] sm:$0xf]
    %v891 = vld [vmem:[%s4 + $0x18] sm:$0xf]
    %v892 = vld [vmem:[%s4 + $0x1c] sm:$0xf]
    %v893 = vld [vmem:[%s4 + $0x20] sm:$0xf]
    %v894 = vld [vmem:[%s4 + $0x24] sm:$0xf]
    %v895 = vld [vmem:[%s4 + $0x28] sm:$0xf]
    %v896 = vld [vmem:[%s4 + $0x2c] sm:$0xf]
    %v897 = vld [vmem:[%s4 + $0x30] sm:$0xf]
    %v898 = vld [vmem:[%s4 + $0x34] sm:$0xf]
    %v899 = vld [vmem:[%s4 + $0x38] sm:$0xf]
    %v900 = vld [vmem:[%s4 + $0x3c] sm:$0xf]
    %v917 = vunpack.c.l.b16 %v885
    %v918 = vunpack.c.l.b16 %v886
    %v919 = vunpack.c.l.b16 %v887
    %v920 = vunpack.c.l.b16 %v888
    %v921 = vunpack.c.l.b16 %v889
    %v922 = vunpack.c.l.b16 %v890
    %v923 = vunpack.c.l.b16 %v891
    %v924 = vunpack.c.l.b16 %v892
    %v925 = vunpack.c.l.b16 %v893
    %v926 = vunpack.c.l.b16 %v894
    %v927 = vunpack.c.l.b16 %v895
    %v928 = vunpack.c.l.b16 %v896
    %v929 = vunpack.c.l.b16 %v897
    %v930 = vunpack.c.l.b16 %v898
    %v931 = vunpack.c.l.b16 %v899
    %v932 = vunpack.c.l.b16 %v900
    %v933 = vpack.c.b16 %v918, %v917
    %v934 = vpack.c.b16 %v920, %v919
    %v935 = vpack.c.b16 %v922, %v921
    %v936 = vpack.c.b16 %v924, %v923
    %v937 = vpack.c.b16 %v926, %v925
    %v938 = vpack.c.b16 %v928, %v927
    %v939 = vpack.c.b16 %v930, %v929
    %v940 = vpack.c.b16 %v932, %v931
    %949 = vmatprep.subr.bf16.mxu0 0
    %950 = vmatpush1.bf16.msra.mxu0 %v933
    %951 = vmatprep.subr.bf16.mxu0 0
    %952 = vmatpush1.bf16.msra.mxu0 %v934
    %953 = vmatprep.subr.bf16.mxu0 0
    %954 = vmatpush1.bf16.msra.mxu0 %v935
    %955 = vmatprep.subr.bf16.mxu0 0
    %956 = vmatpush1.bf16.msra.mxu0 %v936
    %957 = vmatprep.subr.bf16.mxu0 0
    %958 = vmatpush1.bf16.msra.mxu0 %v937
    %959 = vmatprep.subr.bf16.mxu0 0
    %960 = vmatpush1.bf16.msra.mxu0 %v938
    %961 = vmatprep.subr.bf16.mxu0 0
    %962 = vmatpush1.bf16.msra.mxu0 %v939
    %963 = vmatprep.subr.bf16.mxu0 0
    %964 = vmatpush1.bf16.msra.mxu0 %v940
    %965 = vmatprep.subr.bf16.mxu0 0
    %966 = vmatpush1.bf16.msra.mxu0 0
    %967 = vmatprep.subr.bf16.mxu0 0
    %968 = vmatpush1.bf16.msra.mxu0 0
    %969 = vmatprep.subr.bf16.mxu0 0
    %970 = vmatpush1.bf16.msra.mxu0 0
    %971 = vmatprep.subr.bf16.mxu0 0
    %972 = vmatpush1.bf16.msra.mxu0 0
    %973 = vmatprep.subr.bf16.mxu0 0
    %974 = vmatpush1.bf16.msra.mxu0 0
    %975 = vmatprep.subr.bf16.mxu0 0
    %976 = vmatpush1.bf16.msra.mxu0 0
    %977 = vmatprep.subr.bf16.mxu0 0
    %978 = vmatpush1.bf16.msra.mxu0 0
    %979 = vmatprep.subr.bf16.mxu0 0
    %980 = vmatpush1.bf16.msra.mxu0 0
    %981 = vmatprep.mubr.bf16.mxu0 0
    %982 = vmatmul.mubr.bf16.gmra.mrb[0].mxu0 %v862
    %v983 = vpop.f32.mrb[0].mxu0
    %v984 = vadd.f32 0.0, %v983
    %v985 = vpop.f32.mrb[0].mxu0
    %v986 = vpop.f32.mrb[0].mxu0
    %v987 = vadd.f32 0.0, %v986
    %v988 = vpop.f32.mrb[0].mxu0
    %989 = vmatprep.mubr.bf16.mxu0 0
    %990 = vmatmul.mubr.bf16.gmra.mrb[0].mxu0 %v865
    %v991 = vpop.f32.mrb[0].mxu0
    %v992 = vadd.f32 0.0, %v991
    %v993 = vpop.f32.mrb[0].mxu0
    %v994 = vpop.f32.mrb[0].mxu0
    %v995 = vadd.f32 0.0, %v994
    %v996 = vpop.f32.mrb[0].mxu0
    %997 = vmatprep.mubr.bf16.mxu0 0
    %998 = vmatmul.mubr.bf16.gmra.mrb[0].mxu0 %v868
    %v999 = vpop.f32.mrb[0].mxu0
    %v1000 = vadd.f32 0.0, %v999
    %v1001 = vpop.f32.mrb[0].mxu0
    %v1002 = vpop.f32.mrb[0].mxu0
    %v1003 = vadd.f32 0.0, %v1002
    %v1004 = vpop.f32.mrb[0].mxu0
    %1005 = vmatprep.mubr.bf16.mxu0 0
    %1006 = vmatmul.mubr.bf16.gmra.mrb[0].mxu0 %v871
    %v1007 = vpop.f32.mrb[0].mxu0
    %v1008 = vadd.f32 0.0, %v1007
    %v1009 = vpop.f32.mrb[0].mxu0
    %v1010 = vpop.f32.mrb[0].mxu0
    %v1011 = vadd.f32 0.0, %v1010
    %v1012 = vpop.f32.mrb[0].mxu0
    %1013 = vmatprep.mubr.bf16.mxu0 0
    %1014 = vmatmul.mubr.bf16.gmra.mrb[0].mxu0 %v874
    %v1015 = vpop.f32.mrb[0].mxu0
    %v1016 = vadd.f32 0.0, %v1015
    %v1017 = vpop.f32.mrb[0].mxu0
    %v1018 = vpop.f32.mrb[0].mxu0
    %v1019 = vadd.f32 0.0, %v1018
    %v1020 = vpop.f32.mrb[0].mxu0
    %1021 = vmatprep.mubr.bf16.mxu0 0
    %1022 = vmatmul.mubr.bf16.gmra.mrb[0].mxu0 %v877
    %v1023 = vpop.f32.mrb[0].mxu0
    %v1024 = vadd.f32 0.0, %v1023
    %v1025 = vpop.f32.mrb[0].mxu0
    %v1026 = vpop.f32.mrb[0].mxu0
    %v1027 = vadd.f32 0.0, %v1026
    %v1028 = vpop.f32.mrb[0].mxu0
    %1029 = vmatprep.mubr.bf16.mxu0 0
    %1030 = vmatmul.mubr.bf16.gmra.mrb[0].mxu0 %v880
    %v1031 = vpop.f32.mrb[0].mxu0
    %v1032 = vadd.f32 0.0, %v1031
    %v1033 = vpop.f32.mrb[0].mxu0
    %v1034 = vpop.f32.mrb[0].mxu0
    %v1035 = vadd.f32 0.0, %v1034
    %v1036 = vpop.f32.mrb[0].mxu0
    %1037 = vmatprep.mubr.bf16.mxu0 0
    %1038 = vmatmul.mubr.bf16.gmra.mrb[0].mxu0 %v883
    %v1039 = vpop.f32.mrb[0].mxu0
    %v1040 = vadd.f32 0.0, %v1039
    %v1041 = vpop.f32.mrb[0].mxu0
    %v1042 = vpop.f32.mrb[0].mxu0
    %v1043 = vadd.f32 0.0, %v1042
    %v1044 = vpop.f32.mrb[0].mxu0
    %1045 = vdwg.mxu0
    %vm1046 = vcmp.lt.s32.totalorder %v684, 13
    %vm1047 = vcmp.lt.s32.totalorder %v685, 13
    %v1048 = vsel %vm1046, %v984, -1e+30
    %v1049 = vsel %vm1047, %v987, -1e+30
    %v1050 = vsel %vm1046, %v992, -1e+30
    %v1051 = vsel %vm1047, %v995, -1e+30
    %v1052 = vsel %vm1046, %v1000, -1e+30
    %v1053 = vsel %vm1047, %v1003, -1e+30
    %v1054 = vsel %vm1046, %v1008, -1e+30
    %v1055 = vsel %vm1047, %v1011, -1e+30
    %v1056 = vsel %vm1046, %v1016, -1e+30
    %v1057 = vsel %vm1047, %v1019, -1e+30
    %v1058 = vsel %vm1046, %v1024, -1e+30
    %v1059 = vsel %vm1047, %v1027, -1e+30
    %v1060 = vsel %vm1046, %v1032, -1e+30
    %v1061 = vsel %vm1047, %v1035, -1e+30
    %v1062 = vsel %vm1046, %v1040, -1e+30
    %v1063 = vsel %vm1047, %v1043, -1e+30
    %v1064 = vmax.f32 %v1048, %v1049
    %v1065 = vrot.slane %v1064, 4
    %v1066 = vmax.f32 %v1064, %v1065
    %v1067 = vrot.slane %v1066, 2
    %v1068 = vmax.f32 %v1066, %v1067
    %v1069 = vrot.slane %v1068, 1
    %v1070 = vmax.f32 %v1068, %v1069
    %v1071 = vmax.f32 %v1050, %v1051
    %v1072 = vrot.slane %v1071, 4
    %v1073 = vmax.f32 %v1071, %v1072
    %v1074 = vrot.slane %v1073, 2
    %v1075 = vmax.f32 %v1073, %v1074
    %v1076 = vrot.slane %v1075, 1
    %v1077 = vmax.f32 %v1075, %v1076
    %v1078 = vmax.f32 %v1052, %v1053
    %v1079 = vrot.slane %v1078, 4
    %v1080 = vmax.f32 %v1078, %v1079
    %v1081 = vrot.slane %v1080, 2
    %v1082 = vmax.f32 %v1080, %v1081
    %v1083 = vrot.slane %v1082, 1
    %v1084 = vmax.f32 %v1082, %v1083
    %v1085 = vmax.f32 %v1054, %v1055
    %v1086 = vrot.slane %v1085, 4
    %v1087 = vmax.f32 %v1085, %v1086
    %v1088 = vrot.slane %v1087, 2
    %v1089 = vmax.f32 %v1087, %v1088
    %v1090 = vrot.slane %v1089, 1
    %v1091 = vmax.f32 %v1089, %v1090
    %v1092 = vmax.f32 %v1056, %v1057
    %v1093 = vrot.slane %v1092, 4
    %v1094 = vmax.f32 %v1092, %v1093
    %v1095 = vrot.slane %v1094, 2
    %v1096 = vmax.f32 %v1094, %v1095
    %v1097 = vrot.slane %v1096, 1
    %v1098 = vmax.f32 %v1096, %v1097
    %v1099 = vmax.f32 %v1058, %v1059
    %v1100 = vrot.slane %v1099, 4
    %v1101 = vmax.f32 %v1099, %v1100
    %v1102 = vrot.slane %v1101, 2
    %v1103 = vmax.f32 %v1101, %v1102
    %v1104 = vrot.slane %v1103, 1
    %v1105 = vmax.f32 %v1103, %v1104
    %v1106 = vmax.f32 %v1060, %v1061
    %v1107 = vrot.slane %v1106, 4
    %v1108 = vmax.f32 %v1106, %v1107
    %v1109 = vrot.slane %v1108, 2
    %v1110 = vmax.f32 %v1108, %v1109
    %v1111 = vrot.slane %v1110, 1
    %v1112 = vmax.f32 %v1110, %v1111
    %v1113 = vmax.f32 %v1062, %v1063
    %v1114 = vrot.slane %v1113, 4
    %v1115 = vmax.f32 %v1113, %v1114
    %v1116 = vrot.slane %v1115, 2
    %v1117 = vmax.f32 %v1115, %v1116
    %v1118 = vrot.slane %v1117, 1
    %v1119 = vmax.f32 %v1117, %v1118
    %v1120 = vld [vmem:[%s5] sm:$0x1]
    %v1122 = vlaneseq
    %v1123 = vshrl.u32 %v1122, 7
    %v1124 = vsub.s32 0, %v1123
    %v1125 = vrot.slane %v1120, %v1124
    %v1127 = vadd.f32 %v1070, %v1125
    %v1128 = vadd.f32 %v1077, %v1125
    %v1129 = vadd.f32 %v1084, %v1125
    %v1130 = vadd.f32 %v1091, %v1125
    %v1131 = vadd.f32 %v1098, %v1125
    %v1132 = vadd.f32 %v1105, %v1125
    %v1133 = vadd.f32 %v1112, %v1125
    %v1134 = vadd.f32 %v1119, %v1125
    %v1135 = vmax.f32 %v1127, 0.0
    %v1136 = vmax.f32 %v1128, 0.0
    %v1137 = vmax.f32 %v1129, 0.0
    %v1138 = vmax.f32 %v1130, 0.0
    %v1139 = vmax.f32 %v1131, 0.0
    %v1140 = vmax.f32 %v1132, 0.0
    %v1141 = vmax.f32 %v1133, 0.0
    %v1142 = vmax.f32 %v1134, 0.0
    %v1143 = vpack.c.bf16 %v1135, %v1135
    %v1144 = vpack.c.bf16 %v1136, %v1136
    %v1145 = vpack.c.bf16 %v1137, %v1137
    %v1146 = vpack.c.bf16 %v1138, %v1138
    %v1147 = vpack.c.bf16 %v1139, %v1139
    %v1148 = vpack.c.bf16 %v1140, %v1140
    %v1149 = vpack.c.bf16 %v1141, %v1141
    %v1150 = vpack.c.bf16 %v1142, %v1142
    %v1151 = vld [vmem:[#allocation5] sm:$0xf]
    %v1152 = vld [vmem:[#allocation5 + $0x4] sm:$0xf]
    %v1153 = vld [vmem:[#allocation5 + $0x8] sm:$0xf]
    %v1154 = vld [vmem:[#allocation5 + $0xc] sm:$0xf]
    %v1155 = vld [vmem:[#allocation5 + $0x10] sm:$0xf]
    %v1156 = vld [vmem:[#allocation5 + $0x14] sm:$0xf]
    %v1157 = vld [vmem:[#allocation5 + $0x18] sm:$0xf]
    %v1158 = vld [vmem:[#allocation5 + $0x1c] sm:$0xf]
    %v1159 = vld [vmem:[#allocation5 + $0x20] sm:$0xf]
    %v1160 = vld [vmem:[#allocation5 + $0x24] sm:$0xf]
    %v1161 = vld [vmem:[#allocation5 + $0x28] sm:$0xf]
    %v1162 = vld [vmem:[#allocation5 + $0x2c] sm:$0xf]
    %v1163 = vld [vmem:[#allocation5 + $0x30] sm:$0xf]
    %v1164 = vld [vmem:[#allocation5 + $0x34] sm:$0xf]
    %v1165 = vld [vmem:[#allocation5 + $0x38] sm:$0xf]
    %v1166 = vld [vmem:[#allocation5 + $0x3c] sm:$0xf]
    %v1175 = vunpack.c.l.b16 %v1143
    %v1176 = vunpack.c.l.b16 %v1144
    %v1177 = vunpack.c.l.b16 %v1145
    %v1178 = vunpack.c.l.b16 %v1146
    %v1179 = vunpack.c.l.b16 %v1147
    %v1180 = vunpack.c.l.b16 %v1148
    %v1181 = vunpack.c.l.b16 %v1149
    %v1182 = vunpack.c.l.b16 %v1150
    %v1183 = vrot.slane %v1176, 7
    %vm1184 = vcmask 1041409
    %v1185 = vsel %vm1184, %v1183, %v1175
    %v1186 = vrot.slane %v1177, 6
    %vm1187 = vcmask 1042434
    %v1188 = vsel %vm1187, %v1186, %v1185
    %v1189 = vrot.slane %v1178, 5
    %vm1190 = vcmask 1043459
    %v1191 = vsel %vm1190, %v1189, %v1188
    %v1192 = vrot.slane %v1179, 4
    %vm1193 = vcmask 1044484
    %v1194 = vsel %vm1193, %v1192, %v1191
    %v1195 = vrot.slane %v1180, 3
    %vm1196 = vcmask 1045509
    %v1197 = vsel %vm1196, %v1195, %v1194
    %v1198 = vrot.slane %v1181, 2
    %vm1199 = vcmask 1046534
    %v1200 = vsel %vm1199, %v1198, %v1197
    %v1201 = vrot.slane %v1182, 1
    %vm1202 = vcmask 1047559
    %v1203 = vsel %vm1202, %v1201, %v1200
    %v1204 = vpack.c.b16 %v1203, %v1203
    %v1222 = vunpack.c.l.b16 %v1151
    %v1223 = vunpack.c.l.b16 %v1152
    %v1224 = vunpack.c.l.b16 %v1153
    %v1225 = vunpack.c.l.b16 %v1154
    %v1226 = vunpack.c.l.b16 %v1155
    %v1227 = vunpack.c.l.b16 %v1156
    %v1228 = vunpack.c.l.b16 %v1157
    %v1229 = vunpack.c.l.b16 %v1158
    %v1230 = vunpack.c.l.b16 %v1159
    %v1231 = vunpack.c.l.b16 %v1160
    %v1232 = vunpack.c.l.b16 %v1161
    %v1233 = vunpack.c.l.b16 %v1162
    %v1234 = vunpack.c.l.b16 %v1163
    %v1235 = vunpack.c.l.b16 %v1164
    %v1236 = vunpack.c.l.b16 %v1165
    %v1237 = vunpack.c.l.b16 %v1166
    %v1238 = vpack.c.b16 %v1223, %v1222
    %v1239 = vpack.c.b16 %v1225, %v1224
    %v1240 = vpack.c.b16 %v1227, %v1226
    %v1241 = vpack.c.b16 %v1229, %v1228
    %v1242 = vpack.c.b16 %v1231, %v1230
    %v1243 = vpack.c.b16 %v1233, %v1232
    %v1244 = vpack.c.b16 %v1235, %v1234
    %v1245 = vpack.c.b16 %v1237, %v1236
    %1254 = vmatprep.subr.bf16.mxu0 0
    %1255 = vmatpush1.bf16.msra.mxu0 %v1238
    %1256 = vmatprep.subr.bf16.mxu0 0
    %1257 = vmatpush1.bf16.msra.mxu0 %v1239
    %1258 = vmatprep.subr.bf16.mxu0 0
    %1259 = vmatpush1.bf16.msra.mxu0 %v1240
    %1260 = vmatprep.subr.bf16.mxu0 0
    %1261 = vmatpush1.bf16.msra.mxu0 %v1241
    %1262 = vmatprep.subr.bf16.mxu0 0
    %1263 = vmatpush1.bf16.msra.mxu0 %v1242
    %1264 = vmatprep.subr.bf16.mxu0 0
    %1265 = vmatpush1.bf16.msra.mxu0 %v1243
    %1266 = vmatprep.subr.bf16.mxu0 0
    %1267 = vmatpush1.bf16.msra.mxu0 %v1244
    %1268 = vmatprep.subr.bf16.mxu0 0
    %1269 = vmatpush1.bf16.msra.mxu0 %v1245
    %1270 = vmatprep.subr.bf16.mxu0 0
    %1271 = vmatpush1.bf16.msra.mxu0 0
    %1272 = vmatprep.subr.bf16.mxu0 0
    %1273 = vmatpush1.bf16.msra.mxu0 0
    %1274 = vmatprep.subr.bf16.mxu0 0
    %1275 = vmatpush1.bf16.msra.mxu0 0
    %1276 = vmatprep.subr.bf16.mxu0 0
    %1277 = vmatpush1.bf16.msra.mxu0 0
    %1278 = vmatprep.subr.bf16.mxu0 0
    %1279 = vmatpush1.bf16.msra.mxu0 0
    %1280 = vmatprep.subr.bf16.mxu0 0
    %1281 = vmatpush1.bf16.msra.mxu0 0
    %1282 = vmatprep.subr.bf16.mxu0 0
    %1283 = vmatpush1.bf16.msra.mxu0 0
    %1284 = vmatprep.subr.bf16.mxu0 0
    %1285 = vmatpush1.bf16.msra.mxu0 0
    %1286 = vmatprep.mubr.bf16.mxu0 0
    %1287 = vmatmul.mubr.bf16.gmra.mrb[0].mxu0 %v1204
    %v1288 = vpop.f32.mrb[0].mxu0
    %v1289 = vadd.f32 0.0, %v1288
    %v1290 = vpop.f32.mrb[0].mxu0
    %v1291 = vpop.f32.mrb[0].mxu0
    %v1292 = vpop.f32.mrb[0].mxu0
    %1293 = vdwg.mxu0
    %v1302 = vunpack.c.l.b16 %v783
    %v1303 = vunpack.c.l.b16 %v784
    %v1304 = vunpack.c.l.b16 %v785
    %v1305 = vunpack.c.l.b16 %v786
    %v1306 = vunpack.c.l.b16 %v787
    %v1307 = vunpack.c.l.b16 %v788
    %v1308 = vunpack.c.l.b16 %v789
    %v1309 = vunpack.c.l.b16 %v790
    %v1310 = vrot.slane %v1303, 7
    %v1311 = vsel %vm1184, %v1310, %v1302
    %v1312 = vrot.slane %v1304, 6
    %v1313 = vsel %vm1187, %v1312, %v1311
    %v1314 = vrot.slane %v1305, 5
    %v1315 = vsel %vm1190, %v1314, %v1313
    %v1316 = vrot.slane %v1306, 4
    %v1317 = vsel %vm1193, %v1316, %v1315
    %v1318 = vrot.slane %v1307, 3
    %v1319 = vsel %vm1196, %v1318, %v1317
    %v1320 = vrot.slane %v1308, 2
    %v1321 = vsel %vm1199, %v1320, %v1319
    %v1322 = vrot.slane %v1309, 1
    %v1323 = vsel %vm1202, %v1322, %v1321
    %v1324 = vpack.c.b16 %v1323, %v1323
    %v1342 = vunpack.c.l.b16 %v791
    %v1343 = vunpack.c.l.b16 %v792
    %v1344 = vunpack.c.l.b16 %v793
    %v1345 = vunpack.c.l.b16 %v794
    %v1346 = vunpack.c.l.b16 %v795
    %v1347 = vunpack.c.l.b16 %v796
    %v1348 = vunpack.c.l.b16 %v797
    %v1349 = vunpack.c.l.b16 %v798
    %v1350 = vunpack.c.l.b16 %v799
    %v1351 = vunpack.c.l.b16 %v800
    %v1352 = vunpack.c.l.b16 %v801
    %v1353 = vunpack.c.l.b16 %v802
    %v1354 = vunpack.c.l.b16 %v803
    %v1355 = vunpack.c.l.b16 %v804
    %v1356 = vunpack.c.l.b16 %v805
    %v1357 = vunpack.c.l.b16 %v806
    %v1358 = vpack.c.b16 %v1343, %v1342
    %v1359 = vpack.c.b16 %v1345, %v1344
    %v1360 = vpack.c.b16 %v1347, %v1346
    %v1361 = vpack.c.b16 %v1349, %v1348
    %v1362 = vpack.c.b16 %v1351, %v1350
    %v1363 = vpack.c.b16 %v1353, %v1352
    %v1364 = vpack.c.b16 %v1355, %v1354
    %v1365 = vpack.c.b16 %v1357, %v1356
    %1374 = vmatprep.subr.bf16.mxu0 0
    %1375 = vmatpush1.bf16.msra.mxu0 %v1358
    %1376 = vmatprep.subr.bf16.mxu0 0
    %1377 = vmatpush1.bf16.msra.mxu0 %v1359
    %1378 = vmatprep.subr.bf16.mxu0 0
    %1379 = vmatpush1.bf16.msra.mxu0 %v1360
    %1380 = vmatprep.subr.bf16.mxu0 0
    %1381 = vmatpush1.bf16.msra.mxu0 %v1361
    %1382 = vmatprep.subr.bf16.mxu0 0
    %1383 = vmatpush1.bf16.msra.mxu0 %v1362
    %1384 = vmatprep.subr.bf16.mxu0 0
    %1385 = vmatpush1.bf16.msra.mxu0 %v1363
    %1386 = vmatprep.subr.bf16.mxu0 0
    %1387 = vmatpush1.bf16.msra.mxu0 %v1364
    %1388 = vmatprep.subr.bf16.mxu0 0
    %1389 = vmatpush1.bf16.msra.mxu0 %v1365
    %1390 = vmatprep.subr.bf16.mxu0 0
    %1391 = vmatpush1.bf16.msra.mxu0 0
    %1392 = vmatprep.subr.bf16.mxu0 0
    %1393 = vmatpush1.bf16.msra.mxu0 0
    %1394 = vmatprep.subr.bf16.mxu0 0
    %1395 = vmatpush1.bf16.msra.mxu0 0
    %1396 = vmatprep.subr.bf16.mxu0 0
    %1397 = vmatpush1.bf16.msra.mxu0 0
    %1398 = vmatprep.subr.bf16.mxu0 0
    %1399 = vmatpush1.bf16.msra.mxu0 0
    %1400 = vmatprep.subr.bf16.mxu0 0
    %1401 = vmatpush1.bf16.msra.mxu0 0
    %1402 = vmatprep.subr.bf16.mxu0 0
    %1403 = vmatpush1.bf16.msra.mxu0 0
    %1404 = vmatprep.subr.bf16.mxu0 0
    %1405 = vmatpush1.bf16.msra.mxu0 0
    %1406 = vmatprep.mubr.bf16.mxu0 0
    %1407 = vmatmul.mubr.bf16.gmra.mrb[0].mxu0 %v1324
    %v1408 = vpop.f32.mrb[0].mxu0
    %v1409 = vadd.f32 %v1289, %v1408
    %v1410 = vpop.f32.mrb[0].mxu0
    %v1411 = vpop.f32.mrb[0].mxu0
    %v1412 = vpop.f32.mrb[0].mxu0
    %1413 = vdwg.mxu0
    %vm1414 = vcmask 1045504
    %v1415 = vrot.slane %v351, 2
    %v1416 = vrot.slane %v352, 2
    %v1417 = vsel %vm1414, %v1415, %v1416
    %v1418 = vrot.slane %v353, 2
    %v1419 = vsel %vm1414, %v1416, %v1418
    %v1420 = vrot.slane %v354, 2
    %v1421 = vsel %vm1414, %v1418, %v1420
    %v1422 = vrot.slane %v355, 2
    %v1423 = vsel %vm1414, %v1420, %v1422
    %v1424 = vrot.slane %v356, 2
    %v1425 = vsel %vm1414, %v1422, %v1424
    %v1426 = vrot.slane %v357, 2
    %v1427 = vsel %vm1414, %v1424, %v1426
    %v1428 = vrot.slane %v358, 2
    %v1429 = vsel %vm1414, %v1426, %v1428
    %v1430 = vrot.slane 0, 2
    %v1431 = vsel %vm1414, %v1428, %v1430
    %v1432 = vld [vmem:[%s6] sm:$0xf]
    %v1433 = vld [vmem:[%s6 + $0x4] sm:$0xf]
    %v1434 = vld [vmem:[%s6 + $0x8] sm:$0xf]
    %v1435 = vld [vmem:[%s6 + $0xc] sm:$0xf]
    %v1436 = vld [vmem:[%s6 + $0x10] sm:$0xf]
    %v1437 = vld [vmem:[%s6 + $0x14] sm:$0xf]
    %v1438 = vld [vmem:[%s6 + $0x18] sm:$0xf]
    %v1439 = vld [vmem:[%s6 + $0x1c] sm:$0xf]
    %v1440 = vld [vmem:[%s6 + $0x20] sm:$0xf]
    %v1441 = vld [vmem:[%s6 + $0x24] sm:$0xf]
    %v1442 = vld [vmem:[%s6 + $0x28] sm:$0xf]
    %v1443 = vld [vmem:[%s6 + $0x2c] sm:$0xf]
    %v1444 = vld [vmem:[%s6 + $0x30] sm:$0xf]
    %v1445 = vld [vmem:[%s6 + $0x34] sm:$0xf]
    %v1446 = vld [vmem:[%s6 + $0x38] sm:$0xf]
    %v1447 = vld [vmem:[%s6 + $0x3c] sm:$0xf]
    %v1448 = vld [vmem:[%s6 + $0x40] sm:$0xf]
    %v1449 = vld [vmem:[%s6 + $0x44] sm:$0xf]
    %v1450 = vld [vmem:[%s6 + $0x48] sm:$0xf]
    %v1451 = vld [vmem:[%s6 + $0x4c] sm:$0xf]
    %v1472 = vunpack.c.l.b16 %v1432
    %v1473 = vunpack.c.l.b16 %v1433
    %v1474 = vunpack.c.l.b16 %v1434
    %v1475 = vunpack.c.l.b16 %v1435
    %v1476 = vunpack.c.l.b16 %v1436
    %v1477 = vunpack.c.l.b16 %v1437
    %v1478 = vunpack.c.l.b16 %v1438
    %v1479 = vunpack.c.l.b16 %v1439
    %v1480 = vunpack.c.l.b16 %v1440
    %v1481 = vunpack.c.l.b16 %v1441
    %v1482 = vunpack.c.l.b16 %v1442
    %v1483 = vunpack.c.l.b16 %v1443
    %v1484 = vunpack.c.l.b16 %v1444
    %v1485 = vunpack.c.l.b16 %v1445
    %v1486 = vunpack.c.l.b16 %v1446
    %v1487 = vunpack.c.l.b16 %v1447
    %v1488 = vunpack.c.l.b16 %v1448
    %v1489 = vunpack.c.l.b16 %v1449
    %v1490 = vunpack.c.l.b16 %v1450
    %v1491 = vunpack.c.l.b16 %v1451
    %v1492 = vpack.c.b16 %v1473, %v1472
    %v1493 = vpack.c.b16 %v1475, %v1474
    %v1494 = vpack.c.b16 %v1477, %v1476
    %v1495 = vpack.c.b16 %v1479, %v1478
    %v1496 = vpack.c.b16 %v1481, %v1480
    %v1497 = vpack.c.b16 %v1483, %v1482
    %v1498 = vpack.c.b16 %v1485, %v1484
    %v1499 = vpack.c.b16 %v1487, %v1486
    %v1500 = vpack.c.b16 %v1489, %v1488
    %v1501 = vpack.c.b16 %v1491, %v1490
    %v1513 = vsel %vm487, %v1417, 0
    %v1516 = vsel %vm487, %v1419, 0
    %v1519 = vsel %vm487, %v1421, 0
    %v1522 = vsel %vm487, %v1423, 0
    %v1525 = vsel %vm487, %v1425, 0
    %v1528 = vsel %vm487, %v1427, 0
    %v1531 = vsel %vm487, %v1429, 0
    %v1534 = vsel %vm487, %v1431, 0
    %1536 = vmatprep.subr.bf16.mxu0 0
    %1537 = vmatpush1.bf16.msra.mxu0 %v1492
    %1538 = vmatprep.subr.bf16.mxu0 0
    %1539 = vmatpush1.bf16.msra.mxu0 %v1493
    %1540 = vmatprep.subr.bf16.mxu0 0
    %1541 = vmatpush1.bf16.msra.mxu0 %v1494
    %1542 = vmatprep.subr.bf16.mxu0 0
    %1543 = vmatpush1.bf16.msra.mxu0 %v1495
    %1544 = vmatprep.subr.bf16.mxu0 0
    %1545 = vmatpush1.bf16.msra.mxu0 %v1496
    %1546 = vmatprep.subr.bf16.mxu0 0
    %1547 = vmatpush1.bf16.msra.mxu0 %v1497
    %1548 = vmatprep.subr.bf16.mxu0 0
    %1549 = vmatpush1.bf16.msra.mxu0 %v1498
    %1550 = vmatprep.subr.bf16.mxu0 0
    %1551 = vmatpush1.bf16.msra.mxu0 %v1499
    %1552 = vmatprep.subr.bf16.mxu0 0
    %1553 = vmatpush1.bf16.msra.mxu0 %v1500
    %1554 = vmatprep.subr.bf16.mxu0 0
    %1555 = vmatpush1.bf16.msra.mxu0 %v1501
    %1556 = vmatprep.subr.bf16.mxu0 0
    %1557 = vmatpush1.bf16.msra.mxu0 0
    %1558 = vmatprep.subr.bf16.mxu0 0
    %1559 = vmatpush1.bf16.msra.mxu0 0
    %1560 = vmatprep.subr.bf16.mxu0 0
    %1561 = vmatpush1.bf16.msra.mxu0 0
    %1562 = vmatprep.subr.bf16.mxu0 0
    %1563 = vmatpush1.bf16.msra.mxu0 0
    %1564 = vmatprep.subr.bf16.mxu0 0
    %1565 = vmatpush1.bf16.msra.mxu0 0
    %1566 = vmatprep.subr.bf16.mxu0 0
    %1567 = vmatpush1.bf16.msra.mxu0 0
    %1568 = vmatprep.mubr.bf16.mxu0 %v1513
    %1569 = vmatmul.mubr.bf16.gmra.mrb[0].mxu0 %v862
    %v1570 = vpop.f32.mrb[0].mxu0
    %v1571 = vadd.f32 0.0, %v1570
    %v1572 = vpop.f32.mrb[0].mxu0
    %v1573 = vpop.f32.mrb[0].mxu0
    %v1574 = vadd.f32 0.0, %v1573
    %v1575 = vpop.f32.mrb[0].mxu0
    %1576 = vmatprep.mubr.bf16.mxu0 %v1516
    %1577 = vmatmul.mubr.bf16.gmra.mrb[0].mxu0 %v865
    %v1578 = vpop.f32.mrb[0].mxu0
    %v1579 = vadd.f32 0.0, %v1578
    %v1580 = vpop.f32.mrb[0].mxu0
    %v1581 = vpop.f32.mrb[0].mxu0
    %v1582 = vadd.f32 0.0, %v1581
    %v1583 = vpop.f32.mrb[0].mxu0
    %1584 = vmatprep.mubr.bf16.mxu0 %v1519
    %1585 = vmatmul.mubr.bf16.gmra.mrb[0].mxu0 %v868
    %v1586 = vpop.f32.mrb[0].mxu0
    %v1587 = vadd.f32 0.0, %v1586
    %v1588 = vpop.f32.mrb[0].mxu0
    %v1589 = vpop.f32.mrb[0].mxu0
    %v1590 = vadd.f32 0.0, %v1589
    %v1591 = vpop.f32.mrb[0].mxu0
    %1592 = vmatprep.mubr.bf16.mxu0 %v1522
    %1593 = vmatmul.mubr.bf16.gmra.mrb[0].mxu0 %v871
    %v1594 = vpop.f32.mrb[0].mxu0
    %v1595 = vadd.f32 0.0, %v1594
    %v1596 = vpop.f32.mrb[0].mxu0
    %v1597 = vpop.f32.mrb[0].mxu0
    %v1598 = vadd.f32 0.0, %v1597
    %v1599 = vpop.f32.mrb[0].mxu0
    %1600 = vmatprep.mubr.bf16.mxu0 %v1525
    %1601 = vmatmul.mubr.bf16.gmra.mrb[0].mxu0 %v874
    %v1602 = vpop.f32.mrb[0].mxu0
    %v1603 = vadd.f32 0.0, %v1602
    %v1604 = vpop.f32.mrb[0].mxu0
    %v1605 = vpop.f32.mrb[0].mxu0
    %v1606 = vadd.f32 0.0, %v1605
    %v1607 = vpop.f32.mrb[0].mxu0
    %1608 = vmatprep.mubr.bf16.mxu0 %v1528
    %1609 = vmatmul.mubr.bf16.gmra.mrb[0].mxu0 %v877
    %v1610 = vpop.f32.mrb[0].mxu0
    %v1611 = vadd.f32 0.0, %v1610
    %v1612 = vpop.f32.mrb[0].mxu0
    %v1613 = vpop.f32.mrb[0].mxu0
    %v1614 = vadd.f32 0.0, %v1613
    %v1615 = vpop.f32.mrb[0].mxu0
    %1616 = vmatprep.mubr.bf16.mxu0 %v1531
    %1617 = vmatmul.mubr.bf16.gmra.mrb[0].mxu0 %v880
    %v1618 = vpop.f32.mrb[0].mxu0
    %v1619 = vadd.f32 0.0, %v1618
    %v1620 = vpop.f32.mrb[0].mxu0
    %v1621 = vpop.f32.mrb[0].mxu0
    %v1622 = vadd.f32 0.0, %v1621
    %v1623 = vpop.f32.mrb[0].mxu0
    %1624 = vmatprep.mubr.bf16.mxu0 %v1534
    %1625 = vmatmul.mubr.bf16.gmra.mrb[0].mxu0 %v883
    %v1626 = vpop.f32.mrb[0].mxu0
    %v1627 = vadd.f32 0.0, %v1626
    %v1628 = vpop.f32.mrb[0].mxu0
    %v1629 = vpop.f32.mrb[0].mxu0
    %v1630 = vadd.f32 0.0, %v1629
    %v1631 = vpop.f32.mrb[0].mxu0
    %1632 = vdwg.mxu0
    %vm1633 = vcmp.lt.s32.totalorder %v684, 12
    %vm1634 = vcmp.lt.s32.totalorder %v685, 12
    %v1635 = vsel %vm1633, %v1571, -1e+30
    %v1636 = vsel %vm1634, %v1574, -1e+30
    %v1637 = vsel %vm1633, %v1579, -1e+30
    %v1638 = vsel %vm1634, %v1582, -1e+30
    %v1639 = vsel %vm1633, %v1587, -1e+30
    %v1640 = vsel %vm1634, %v1590, -1e+30
    %v1641 = vsel %vm1633, %v1595, -1e+30
    %v1642 = vsel %vm1634, %v1598, -1e+30
    %v1643 = vsel %vm1633, %v1603, -1e+30
    %v1644 = vsel %vm1634, %v1606, -1e+30
    %v1645 = vsel %vm1633, %v1611, -1e+30
    %v1646 = vsel %vm1634, %v1614, -1e+30
    %v1647 = vsel %vm1633, %v1619, -1e+30
    %v1648 = vsel %vm1634, %v1622, -1e+30
    %v1649 = vsel %vm1633, %v1627, -1e+30
    %v1650 = vsel %vm1634, %v1630, -1e+30
    %v1651 = vmax.f32 %v1635, %v1636
    %v1652 = vrot.slane %v1651, 4
    %v1653 = vmax.f32 %v1651, %v1652
    %v1654 = vrot.slane %v1653, 2
    %v1655 = vmax.f32 %v1653, %v1654
    %v1656 = vrot.slane %v1655, 1
    %v1657 = vmax.f32 %v1655, %v1656
    %v1658 = vmax.f32 %v1637, %v1638
    %v1659 = vrot.slane %v1658, 4
    %v1660 = vmax.f32 %v1658, %v1659
    %v1661 = vrot.slane %v1660, 2
    %v1662 = vmax.f32 %v1660, %v1661
    %v1663 = vrot.slane %v1662, 1
    %v1664 = vmax.f32 %v1662, %v1663
    %v1665 = vmax.f32 %v1639, %v1640
    %v1666 = vrot.slane %v1665, 4
    %v1667 = vmax.f32 %v1665, %v1666
    %v1668 = vrot.slane %v1667, 2
    %v1669 = vmax.f32 %v1667, %v1668
    %v1670 = vrot.slane %v1669, 1
    %v1671 = vmax.f32 %v1669, %v1670
    %v1672 = vmax.f32 %v1641, %v1642
    %v1673 = vrot.slane %v1672, 4
    %v1674 = vmax.f32 %v1672, %v1673
    %v1675 = vrot.slane %v1674, 2
    %v1676 = vmax.f32 %v1674, %v1675
    %v1677 = vrot.slane %v1676, 1
    %v1678 = vmax.f32 %v1676, %v1677
    %v1679 = vmax.f32 %v1643, %v1644
    %v1680 = vrot.slane %v1679, 4
    %v1681 = vmax.f32 %v1679, %v1680
    %v1682 = vrot.slane %v1681, 2
    %v1683 = vmax.f32 %v1681, %v1682
    %v1684 = vrot.slane %v1683, 1
    %v1685 = vmax.f32 %v1683, %v1684
    %v1686 = vmax.f32 %v1645, %v1646
    %v1687 = vrot.slane %v1686, 4
    %v1688 = vmax.f32 %v1686, %v1687
    %v1689 = vrot.slane %v1688, 2
    %v1690 = vmax.f32 %v1688, %v1689
    %v1691 = vrot.slane %v1690, 1
    %v1692 = vmax.f32 %v1690, %v1691
    %v1693 = vmax.f32 %v1647, %v1648
    %v1694 = vrot.slane %v1693, 4
    %v1695 = vmax.f32 %v1693, %v1694
    %v1696 = vrot.slane %v1695, 2
    %v1697 = vmax.f32 %v1695, %v1696
    %v1698 = vrot.slane %v1697, 1
    %v1699 = vmax.f32 %v1697, %v1698
    %v1700 = vmax.f32 %v1649, %v1650
    %v1701 = vrot.slane %v1700, 4
    %v1702 = vmax.f32 %v1700, %v1701
    %v1703 = vrot.slane %v1702, 2
    %v1704 = vmax.f32 %v1702, %v1703
    %v1705 = vrot.slane %v1704, 1
    %v1706 = vmax.f32 %v1704, %v1705
    %v1707 = vld [vmem:[%s7] sm:$0x1]
    %v1709 = vlaneseq
    %v1710 = vshrl.u32 %v1709, 7
    %v1711 = vsub.s32 0, %v1710
    %v1712 = vrot.slane %v1707, %v1711
    %v1714 = vadd.f32 %v1657, %v1712
    %v1715 = vadd.f32 %v1664, %v1712
    %v1716 = vadd.f32 %v1671, %v1712
    %v1717 = vadd.f32 %v1678, %v1712
    %v1718 = vadd.f32 %v1685, %v1712
    %v1719 = vadd.f32 %v1692, %v1712
    %v1720 = vadd.f32 %v1699, %v1712
    %v1721 = vadd.f32 %v1706, %v1712
    %v1722 = vmax.f32 %v1714, 0.0
    %v1723 = vmax.f32 %v1715, 0.0
    %v1724 = vmax.f32 %v1716, 0.0
    %v1725 = vmax.f32 %v1717, 0.0
    %v1726 = vmax.f32 %v1718, 0.0
    %v1727 = vmax.f32 %v1719, 0.0
    %v1728 = vmax.f32 %v1720, 0.0
    %v1729 = vmax.f32 %v1721, 0.0
    %v1730 = vpack.c.bf16 %v1722, %v1722
    %v1731 = vpack.c.bf16 %v1723, %v1723
    %v1732 = vpack.c.bf16 %v1724, %v1724
    %v1733 = vpack.c.bf16 %v1725, %v1725
    %v1734 = vpack.c.bf16 %v1726, %v1726
    %v1735 = vpack.c.bf16 %v1727, %v1727
    %v1736 = vpack.c.bf16 %v1728, %v1728
    %v1737 = vpack.c.bf16 %v1729, %v1729
    %v1738 = vld [vmem:[#allocation7] sm:$0xf]
    %v1739 = vld [vmem:[#allocation7 + $0x4] sm:$0xf]
    %v1740 = vld [vmem:[#allocation7 + $0x8] sm:$0xf]
    %v1741 = vld [vmem:[#allocation7 + $0xc] sm:$0xf]
    %v1742 = vld [vmem:[#allocation7 + $0x10] sm:$0xf]
    %v1743 = vld [vmem:[#allocation7 + $0x14] sm:$0xf]
    %v1744 = vld [vmem:[#allocation7 + $0x18] sm:$0xf]
    %v1745 = vld [vmem:[#allocation7 + $0x1c] sm:$0xf]
    %v1746 = vld [vmem:[#allocation7 + $0x20] sm:$0xf]
    %v1747 = vld [vmem:[#allocation7 + $0x24] sm:$0xf]
    %v1748 = vld [vmem:[#allocation7 + $0x28] sm:$0xf]
    %v1749 = vld [vmem:[#allocation7 + $0x2c] sm:$0xf]
    %v1750 = vld [vmem:[#allocation7 + $0x30] sm:$0xf]
    %v1751 = vld [vmem:[#allocation7 + $0x34] sm:$0xf]
    %v1752 = vld [vmem:[#allocation7 + $0x38] sm:$0xf]
    %v1753 = vld [vmem:[#allocation7 + $0x3c] sm:$0xf]
    %v1762 = vunpack.c.l.b16 %v1730
    %v1763 = vunpack.c.l.b16 %v1731
    %v1764 = vunpack.c.l.b16 %v1732
    %v1765 = vunpack.c.l.b16 %v1733
    %v1766 = vunpack.c.l.b16 %v1734
    %v1767 = vunpack.c.l.b16 %v1735
    %v1768 = vunpack.c.l.b16 %v1736
    %v1769 = vunpack.c.l.b16 %v1737
    %v1770 = vrot.slane %v1763, 7
    %v1771 = vsel %vm1184, %v1770, %v1762
    %v1772 = vrot.slane %v1764, 6
    %v1773 = vsel %vm1187, %v1772, %v1771
    %v1774 = vrot.slane %v1765, 5
    %v1775 = vsel %vm1190, %v1774, %v1773
    %v1776 = vrot.slane %v1766, 4
    %v1777 = vsel %vm1193, %v1776, %v1775
    %v1778 = vrot.slane %v1767, 3
    %v1779 = vsel %vm1196, %v1778, %v1777
    %v1780 = vrot.slane %v1768, 2
    %v1781 = vsel %vm1199, %v1780, %v1779
    %v1782 = vrot.slane %v1769, 1
    %v1783 = vsel %vm1202, %v1782, %v1781
    %v1784 = vpack.c.b16 %v1783, %v1783
    %v1802 = vunpack.c.l.b16 %v1738
    %v1803 = vunpack.c.l.b16 %v1739
    %v1804 = vunpack.c.l.b16 %v1740
    %v1805 = vunpack.c.l.b16 %v1741
    %v1806 = vunpack.c.l.b16 %v1742
    %v1807 = vunpack.c.l.b16 %v1743
    %v1808 = vunpack.c.l.b16 %v1744
    %v1809 = vunpack.c.l.b16 %v1745
    %v1810 = vunpack.c.l.b16 %v1746
    %v1811 = vunpack.c.l.b16 %v1747
    %v1812 = vunpack.c.l.b16 %v1748
    %v1813 = vunpack.c.l.b16 %v1749
    %v1814 = vunpack.c.l.b16 %v1750
    %v1815 = vunpack.c.l.b16 %v1751
    %v1816 = vunpack.c.l.b16 %v1752
    %v1817 = vunpack.c.l.b16 %v1753
    %v1818 = vpack.c.b16 %v1803, %v1802
    %v1819 = vpack.c.b16 %v1805, %v1804
    %v1820 = vpack.c.b16 %v1807, %v1806
    %v1821 = vpack.c.b16 %v1809, %v1808
    %v1822 = vpack.c.b16 %v1811, %v1810
    %v1823 = vpack.c.b16 %v1813, %v1812
    %v1824 = vpack.c.b16 %v1815, %v1814
    %v1825 = vpack.c.b16 %v1817, %v1816
    %1834 = vmatprep.subr.bf16.mxu0 0
    %1835 = vmatpush1.bf16.msra.mxu0 %v1818
    %1836 = vmatprep.subr.bf16.mxu0 0
    %1837 = vmatpush1.bf16.msra.mxu0 %v1819
    %1838 = vmatprep.subr.bf16.mxu0 0
    %1839 = vmatpush1.bf16.msra.mxu0 %v1820
    %1840 = vmatprep.subr.bf16.mxu0 0
    %1841 = vmatpush1.bf16.msra.mxu0 %v1821
    %1842 = vmatprep.subr.bf16.mxu0 0
    %1843 = vmatpush1.bf16.msra.mxu0 %v1822
    %1844 = vmatprep.subr.bf16.mxu0 0
    %1845 = vmatpush1.bf16.msra.mxu0 %v1823
    %1846 = vmatprep.subr.bf16.mxu0 0
    %1847 = vmatpush1.bf16.msra.mxu0 %v1824
    %1848 = vmatprep.subr.bf16.mxu0 0
    %1849 = vmatpush1.bf16.msra.mxu0 %v1825
    %1850 = vmatprep.subr.bf16.mxu0 0
    %1851 = vmatpush1.bf16.msra.mxu0 0
    %1852 = vmatprep.subr.bf16.mxu0 0
    %1853 = vmatpush1.bf16.msra.mxu0 0
    %1854 = vmatprep.subr.bf16.mxu0 0
    %1855 = vmatpush1.bf16.msra.mxu0 0
    %1856 = vmatprep.subr.bf16.mxu0 0
    %1857 = vmatpush1.bf16.msra.mxu0 0
    %1858 = vmatprep.subr.bf16.mxu0 0
    %1859 = vmatpush1.bf16.msra.mxu0 0
    %1860 = vmatprep.subr.bf16.mxu0 0
    %1861 = vmatpush1.bf16.msra.mxu0 0
    %1862 = vmatprep.subr.bf16.mxu0 0
    %1863 = vmatpush1.bf16.msra.mxu0 0
    %1864 = vmatprep.subr.bf16.mxu0 0
    %1865 = vmatpush1.bf16.msra.mxu0 0
    %1866 = vmatprep.mubr.bf16.mxu0 0
    %1867 = vmatmul.mubr.bf16.gmra.mrb[0].mxu0 %v1784
    %v1868 = vpop.f32.mrb[0].mxu0
    %v1869 = vadd.f32 0.0, %v1868
    %v1870 = vpop.f32.mrb[0].mxu0
    %v1871 = vpop.f32.mrb[0].mxu0
    %v1872 = vpop.f32.mrb[0].mxu0
    %1873 = vdwg.mxu0
    %v1874 = vadd.f32 %v1409, %v1869
    %v1875 = vld [vmem:[%s11] sm:$0x1]
    %v1877 = vlaneseq
    %v1878 = vshrl.u32 %v1877, 7
    %v1879 = vsub.s32 0, %v1878
    %v1880 = vrot.slane %v1875, %v1879
    %v1882 = vadd.f32 %v1874, %v1880
    %1883 = vst [vmem:[#allocation8] sm:$0xff] %v1882
    // Predicated region
    $region62: #{tpu_custom_call.1} parent=1 // pred_check
      _
    $region63: #{tpu_custom_call.1} parent=1 // pred_check_branch
      %1885 = sbr.rel (0) target = $region65
    $region64: #{tpu_custom_call.1} parent=1 // pred_region
      %s1887 = ssub.s32 128, 128
      %1888 = vsyncadd [#allocation4], %s1887
      %s1890 = sshll.u32 [#allocation8], 4
      %s1891 = int_to_ptr.vmem [resolvable:$true] %s1890
      %1893 = dma.vmem_to_hbm [thread:$0]  %s1891, 128, %s12, [#allocation4]
    $region65: #{tpu_custom_call.1} parent=1 // pred_fallthru
      _
    // Predicated region
    $region66: #{tpu_custom_call.1} parent=1 // pred_check
      _
    $region67: #{tpu_custom_call.1} parent=1 // pred_check_branch
      %1895 = sbr.rel (0) target = $region69
    $region68: #{tpu_custom_call.1} parent=1 // pred_region
      %1896 = dma.done [#allocation4], 128
    $region69: #{tpu_custom_call.1} parent=1 // pred_fallthru
      _
    %1897 = vsyncpa [#allocation3], 1
    %1898 = vsyncpa [#allocation6], 1
    %1899 = vsyncpa [#allocation4], 1

</llo_original>
